<compile_context>
chip_gen: v7x
topology: tpu7x:2x2x1
jax: 0.10.0
libtpu: 0.0.40
codegen_flags: <defaults>
</compile_context>

<pallas_src>
import functools

import jax
import jax.numpy as jnp
from jax.experimental import pallas as pl
from jax.experimental.pallas import tpu as pltpu


# --------------------------------------------------------------------------
# Pallas kernel 1: NCHW-native fused (matmul + bias + optional ReLU) 3x3 conv.
# One grid step == one frame:  (Cout, K) @ (K, HW)  ->  (Cout, HW)
# --------------------------------------------------------------------------
def _conv_mm_kernel(cols_ref, w_ref, b_ref, out_ref, *, relu):
    acc = jnp.dot(w_ref[...], cols_ref[0], preferred_element_type=jnp.float32)
    acc = acc + b_ref[...]                     # (Cout, 1) lane-broadcast
    if relu:
        acc = jnp.maximum(acc, 0.0)
    out_ref[0] = acc.astype(out_ref.dtype)


def conv3x3_bias_act(x_nchw, w, b, *, relu):
    """3x3 conv, stride 1, padding 1, bias, optional ReLU.  NCHW in / NCHW out."""
    T, Cin, H, W = x_nchw.shape
    Cout = w.shape[0]
    K = 9 * Cin
    HW = H * W

    # im2col in NCHW (plain-JAX glue):
    #   cols[t, (dy*3+dx)*Cin + cin, i*W+j] = xpad[t, cin, i+dy, j+dx]
    # TODO(synk): im2col materializes a 9x copy of the input in HBM; for the
    # small spatial sizes of this module that is negligible vs launch overhead.
    xp = jnp.pad(x_nchw, ((0, 0), (0, 0), (1, 1), (1, 1)))
    patches = jnp.stack([xp[:, :, dy:dy + H, dx:dx + W]
                         for dy in range(3) for dx in range(3)], axis=1)   # (T,9,Cin,H,W)
    cols = patches.reshape(T, K, HW)

    # PyTorch weight (Cout, Cin, kh, kw) -> (Cout, kh*kw*Cin), matching cols K order
    w_mat = jnp.transpose(w, (0, 2, 3, 1)).reshape(Cout, K)
    b_col = b.reshape(Cout, 1)

    out = pl.pallas_call(
        functools.partial(_conv_mm_kernel, relu=relu),
        out_shape=jax.ShapeDtypeStruct((T, Cout, HW), x_nchw.dtype),
        grid_spec=pltpu.PrefetchScalarGridSpec(
            num_scalar_prefetch=0,
            grid=(T,),
            in_specs=[pl.BlockSpec((1, K, HW), lambda t: (t, 0, 0)),
                      pl.BlockSpec((Cout, K), lambda t: (0, 0)),   # DMA'd once
                      pl.BlockSpec((Cout, 1), lambda t: (0, 0))],  # DMA'd once
            out_specs=pl.BlockSpec((1, Cout, HW), lambda t: (t, 0, 0)),
        ),
        compiler_params=pltpu.CompilerParams(dimension_semantics=("parallel",)),
    )(cols, w_mat, b_col)
    return out.reshape(T, Cout, H, W)          # already NCHW, no transpose


# --------------------------------------------------------------------------
# Pallas kernel 2: TSM temporal channel shift ('zero' version), single-shot.
# Whole (T, C, HW) tensor lives in VMEM; shifts are emitted as bulk static
# slice copies per temporal group (group boundaries are compile-time constants
# -> no masking, no per-frame loop).
#   pre_from_next=True  -> InplaceShift:      ch[:fold]   <- t+1 ; ch[f:2f] <- t-1
#   pre_from_next=False -> learnTSM 'zero':   ch[:fold]   <- t-1 ; ch[f:2f] <- t+1
#                          (within each tsm_length group)
# --------------------------------------------------------------------------
def _tsm_shift_kernel(x_ref, out_ref, *, fold, group_len, pre_from_next):
    n_t, c, hw = out_ref.shape

    if 2 * fold < c:                           # passthrough channels
        out_ref[:, 2 * fold:, :] = x_ref[:, 2 * fold:, :]
    if fold == 0:
        return

    zero = jnp.zeros((fold, hw), dtype=out_ref.dtype)

    for s in range(0, n_t, group_len):         # one temporal group at a time
        e = min(s + group_len, n_t)
        grp = e - s

        def from_next(c0, c1):                 # out[t] = x[t+1], last frame -> 0
            if grp > 1:
                out_ref[s:e - 1, c0:c1, :] = x_ref[s + 1:e, c0:c1, :]
            out_ref[e - 1, c0:c1, :] = zero

        def from_prev(c0, c1):                 # out[t] = x[t-1], first frame -> 0
            if grp > 1:
                out_ref[s + 1:e, c0:c1, :] = x_ref[s:e - 1, c0:c1, :]
            out_ref[s, c0:c1, :] = zero

        if pre_from_next:
            from_next(0, fold)
            from_prev(fold, 2 * fold)
        else:
            from_prev(0, fold)
            from_next(fold, 2 * fold)


def tsm_shift(x_nchw, *, fold, group_len, pre_from_next):
    if fold == 0:                              # out_chn too small: pure passthrough
        return x_nchw
    T, C, H, W = x_nchw.shape
    HW = H * W
    xf = x_nchw.reshape(T, C, HW)
    out = pl.pallas_call(
        functools.partial(_tsm_shift_kernel, fold=fold, group_len=group_len,
                          pre_from_next=pre_from_next),
        out_shape=jax.ShapeDtypeStruct((T, C, HW), x_nchw.dtype),
    )(xf)
    return out.reshape(T, C, H, W)


# --------------------------------------------------------------------------
# Plain-JAX glue: PixelShuffle(2)
# TODO(synk): pure data permutation; left as an XLA reshape/transpose rather
# than being folded into the conv out_spec (non-rectangular channel/space scatter).
# --------------------------------------------------------------------------
def pixel_shuffle2(x_nchw):
    T, C4, H, W = x_nchw.shape
    C = C4 // 4
    y = x_nchw.reshape(T, C, 2, 2, H, W)
    y = jnp.transpose(y, (0, 1, 4, 2, 5, 3))
    return y.reshape(T, C, 2 * H, 2 * W)


# --------------------------------------------------------------------------
# learnTSM forward (version='zero'): ONE fused conv (pre|post|main) + shift
# --------------------------------------------------------------------------
def learn_tsm_forward(x, p, *, tsm_length, alpha=1):
    T, C, H, W = x.shape
    split = C // alpha if alpha > 1 else C
    shift = x[:, :split]
    main = x[:, split:]

    # Fuse the three convs along Cout: output channels are already in the
    # [pre (split//4) | post (split//4) | main_conv (split//2)] order the
    # zero-shift expects, so no channel concat is needed when alpha == 1.
    w_fused = jnp.concatenate([p["pre_w"], p["post_w"], p["main_w"]], axis=0)
    b_fused = jnp.concatenate([p["pre_b"], p["post_b"], p["main_b"]], axis=0)
    conv_out = conv3x3_bias_act(shift, w_fused, b_fused, relu=False)   # (T, split, H, W)

    cat = conv_out if main.shape[1] == 0 else jnp.concatenate([conv_out, main], axis=1)
    return tsm_shift(cat, fold=split // 4, group_len=tsm_length, pre_from_next=False)


# --------------------------------------------------------------------------
# up_block forward
# --------------------------------------------------------------------------
def up_block_forward(x, params, *, out_chn, tsm=False, learn=False,
                     tsm_length=3, alpha=1):
    relu = (out_chn == 64)                  # out_chn==3 -> no ReLU; ==64 -> ReLU
    y = conv3x3_bias_act(x, params["conv1_w"], params["conv1_b"], relu=relu)
    y = pixel_shuffle2(y)
    if tsm:
        if learn:
            y = learn_tsm_forward(y, params, tsm_length=tsm_length, alpha=alpha)
        else:
            # tsm_module(..., inplace=True) == InplaceShift: whole-sequence shift
            y = tsm_shift(y, fold=y.shape[1] // 4, group_len=y.shape[0],
                          pre_from_next=True)
    return y
    # TODO(synk): 'circulant' TSM version not implemented (reference PyTorch
    # path is itself unreachable/buggy in learnTSM); only version='zero'.


# --------------------------------------------------------------------------
# Deterministic parameter init (shapes follow the PyTorch __init__)
# --------------------------------------------------------------------------
def init_params(key, in_chn, out_chn, alpha=1):
    ks = jax.random.split(key, 8)
    s = 0.05
    split = out_chn // alpha if alpha > 1 else out_chn
    return {
        "conv1_w": s * jax.random.normal(ks[0], (out_chn * 4, in_chn, 3, 3), jnp.float32),
        "conv1_b": s * jax.random.normal(ks[1], (out_chn * 4,), jnp.float32),
        "pre_w":  s * jax.random.normal(ks[2], (split // 4, split, 3, 3), jnp.float32),
        "pre_b":  s * jax.random.normal(ks[3], (split // 4,), jnp.float32),
        "post_w": s * jax.random.normal(ks[4], (split // 4, split, 3, 3), jnp.float32),
        "post_b": s * jax.random.normal(ks[5], (split // 4,), jnp.float32),
        "main_w": s * jax.random.normal(ks[6], (split // 2, split, 3, 3), jnp.float32),
        "main_b": s * jax.random.normal(ks[7], (split // 2,), jnp.float32),
    }


# --------------------------------------------------------------------------
# Pure-JAX reference (mirrors the PyTorch code) for a correctness check
# --------------------------------------------------------------------------
def _ref_conv(x, w, b, relu):
    y = jax.lax.conv_general_dilated(x, w, (1, 1), ((1, 1), (1, 1)),
                                     dimension_numbers=("NCHW", "OIHW", "NCHW"))
    y = y + b[None, :, None, None]
    return jnp.maximum(y, 0.0) if relu else y


def _ref_inplace_shift(x):
    T, C, H, W = x.shape
    fold = C // 4
    pre = jnp.concatenate([x[1:, :fold], jnp.zeros((1, fold, H, W), x.dtype)], 0)
    post = jnp.concatenate([jnp.zeros((1, fold, H, W), x.dtype), x[:-1, fold:2 * fold]], 0)
    return jnp.concatenate([pre, post, x[:, 2 * fold:]], 1)


def _ref_learn_tsm(x, p, L, alpha=1):
    T, C, H, W = x.shape
    split = C // alpha if alpha > 1 else C
    shift, main = x[:, :split], x[:, split:]
    mainc = _ref_conv(shift, p["main_w"], p["main_b"], False).reshape(T // L, L, split // 2, H, W)
    pre = _ref_conv(shift, p["pre_w"], p["pre_b"], False).reshape(T // L, L, split // 4, H, W)
    post = _ref_conv(shift, p["post_w"], p["post_b"], False).reshape(T // L, L, split // 4, H, W)
    main = main.reshape(T // L, L, C - split, H, W)
    pre = jnp.concatenate([jnp.zeros_like(pre[:, :1]), pre[:, :-1]], 1)
    post = jnp.concatenate([post[:, 1:], jnp.zeros_like(post[:, :1])], 1)
    return jnp.concatenate([pre, post, mainc, main], 2).reshape(T, C, H, W)


def ref_up_block(x, p, *, out_chn, tsm, learn, tsm_length, alpha=1):
    y = _ref_conv(x, p["conv1_w"], p["conv1_b"], out_chn == 64)
    y = pixel_shuffle2(y)
    if tsm:
        y = _ref_learn_tsm(y, p, tsm_length, alpha) if learn else _ref_inplace_shift(y)
    return y


# --------------------------------------------------------------------------
if __name__ == "__main__":
    key = jax.random.PRNGKey(0)
    kx, kp = jax.random.split(key)

    # spatial 16x16 -> lane-dense conv tiles (HW=256 pre-shuffle, 1024 post)
    T, in_chn, H, W = 6, 32, 16, 16        # T divisible by tsm_length=3
    out_chn = 64
    x = jax.random.normal(kx, (T, in_chn, H, W), jnp.float32)
    params = init_params(kp, in_chn, out_chn)

    # Config A: up_block(in_chn, out_chn=64, tsm=True, learn=False)  -> InplaceShift
    fwd_a = jax.jit(functools.partial(up_block_forward, out_chn=out_chn,
                                      tsm=True, learn=False, tsm_length=3))
    y_a = fwd_a(x, params)
    jax.block_until_ready(y_a)
    ref_a = ref_up_block(x, params, out_chn=out_chn, tsm=True, learn=False, tsm_length=3)
    assert y_a.shape == (T, out_chn, 2 * H, 2 * W)
    assert bool(jnp.allclose(y_a, ref_a, atol=2e-2, rtol=2e-2)), "config A mismatch"

    # Config B: up_block(in_chn, out_chn=64, alpha=1, tsm=True, learn=True) -> learnTSM
    fwd_b = jax.jit(functools.partial(up_block_forward, out_chn=out_chn,
                                      tsm=True, learn=True, tsm_length=3, alpha=1))
    y_b = fwd_b(x, params)
    jax.block_until_ready(y_b)
    ref_b = ref_up_block(x, params, out_chn=out_chn, tsm=True, learn=True, tsm_length=3)
    assert y_b.shape == (T, out_chn, 2 * H, 2 * W)
    assert bool(jnp.allclose(y_b, ref_b, atol=2e-2, rtol=2e-2)), "config B mismatch"

    print("KERNEL_OK")
</pallas_src>

<mosaic_0001>
module attributes {stable_mosaic.version = 11 : i64} {
  func.func @_conv_mm_kernel(%arg0: i32, %arg1: memref<1x288x256xf32, #tpu.memory_space<vmem>>, %arg2: memref<256x288xf32, #tpu.memory_space<vmem>>, %arg3: memref<256x1xf32, #tpu.memory_space<vmem>>, %arg4: memref<1x256x256xf32, #tpu.memory_space<vmem>>) attributes {dimension_semantics = [#tpu.dimension_semantics<parallel>], iteration_bounds = array<i64: 6>, scalar_prefetch = 0 : i64, scratch_operands = 0 : i64, tpu.core_type = #tpu.core_type<tc>, window_params = [{transform_indices = @transform_0, window_bounds = array<i64: 1, 288, 256>}, {pipeline_mode = #tpu.pipeline_mode<synchronous>, transform_indices = @transform_1, window_bounds = array<i64: 256, 288>}, {pipeline_mode = #tpu.pipeline_mode<synchronous>, transform_indices = @transform_2, window_bounds = array<i64: 256, 1>}, {transform_indices = @transform_3, window_bounds = array<i64: 1, 256, 256>}]} {
    %c0 = arith.constant 0 : index
    %c0_0 = arith.constant 0 : index
    %0 = vector.load %arg2[%c0, %c0_0] : memref<256x288xf32, #tpu.memory_space<vmem>>, vector<256x288xf32>
    %c0_1 = arith.constant 0 : index
    %c0_2 = arith.constant 0 : index
    %c0_3 = arith.constant 0 : index
    %1 = vector.load %arg1[%c0_1, %c0_2, %c0_3] : memref<1x288x256xf32, #tpu.memory_space<vmem>>, vector<1x288x256xf32>
    %2 = vector.shape_cast %1 : vector<1x288x256xf32> to vector<288x256xf32>
    %cst = arith.constant dense<0.000000e+00> : vector<256x256xf32>
    %3 = tpu.matmul %0, %2, %cst {dimension_numbers = #tpu.dot_dimension_numbers<[1], [0], [0], [1], [0, 0, 1, 1], [], []>} : vector<256x288xf32>, vector<288x256xf32>, vector<256x256xf32> -> vector<256x256xf32>
    %c0_4 = arith.constant 0 : index
    %c0_5 = arith.constant 0 : index
    %4 = vector.load %arg3[%c0_4, %c0_5] : memref<256x1xf32, #tpu.memory_space<vmem>>, vector<256x1xf32>
    %5 = vector.broadcast %4 : vector<256x1xf32> to vector<256x256xf32>
    %6 = arith.addf %3, %5 : vector<256x256xf32>
    %cst_6 = arith.constant 0.000000e+00 : f32
    %7 = vector.broadcast %cst_6 : f32 to vector<256x256xf32>
    %8 = arith.maximumf %6, %7 : vector<256x256xf32>
    %c0_7 = arith.constant 0 : index
    %c0_8 = arith.constant 0 : index
    %c0_9 = arith.constant 0 : index
    %9 = vector.load %arg4[%c0_7, %c0_8, %c0_9] : memref<1x256x256xf32, #tpu.memory_space<vmem>>, vector<1x256x256xf32>
    %10 = vector.shape_cast %9 : vector<1x256x256xf32> to vector<256x256xf32>
    %11 = vector.shape_cast %8 : vector<256x256xf32> to vector<1x256x256xf32>
    tpu.vector_store %arg4[%c0_7, %c0_8, %c0_9], %11 {strides = array<i32>} : memref<1x256x256xf32, #tpu.memory_space<vmem>>, vector<1x256x256xf32>,
    return
  }
  func.func @transform_0(%arg0: i32) -> (i32, i32, i32) {
    %c0_i32 = arith.constant 0 : i32
    %c0_i32_0 = arith.constant 0 : i32
    %c0_i32_1 = arith.constant 0 : i32
    return %arg0, %c0_i32, %c0_i32_0 : i32, i32, i32
  }
  func.func @transform_1(%arg0: i32) -> (i32, i32) {
    %c0_i32 = arith.constant 0 : i32
    %c0_i32_0 = arith.constant 0 : i32
    %c0_i32_1 = arith.constant 0 : i32
    return %c0_i32, %c0_i32_0 : i32, i32
  }
  func.func @transform_2(%arg0: i32) -> (i32, i32) {
    %c0_i32 = arith.constant 0 : i32
    %c0_i32_0 = arith.constant 0 : i32
    %c0_i32_1 = arith.constant 0 : i32
    return %c0_i32, %c0_i32_0 : i32, i32
  }
  func.func @transform_3(%arg0: i32) -> (i32, i32, i32) {
    %c0_i32 = arith.constant 0 : i32
    %c0_i32_0 = arith.constant 0 : i32
    %c0_i32_1 = arith.constant 0 : i32
    return %arg0, %c0_i32, %c0_i32_0 : i32, i32, i32
  }
}

module attributes {stable_mosaic.version = 11 : i64} {
  func.func @_tsm_shift_kernel(%arg0: memref<6x64x1024xf32, #tpu.memory_space<vmem>>, %arg1: memref<6x64x1024xf32, #tpu.memory_space<vmem>>) attributes {dimension_semantics = [], scalar_prefetch = 0 : i64, scratch_operands = 0 : i64, tpu.core_type = #tpu.core_type<tc>} {
    %c0 = arith.constant 0 : index
    %c32 = arith.constant 32 : index
    %c0_0 = arith.constant 0 : index
    %0 = vector.load %arg0[%c0, %c32, %c0_0] : memref<6x64x1024xf32, #tpu.memory_space<vmem>>, vector<6x32x1024xf32>
    %c0_1 = arith.constant 0 : index
    %c32_2 = arith.constant 32 : index
    %c0_3 = arith.constant 0 : index
    %1 = vector.load %arg1[%c0_1, %c32_2, %c0_3] : memref<6x64x1024xf32, #tpu.memory_space<vmem>>, vector<6x32x1024xf32>
    tpu.vector_store %arg1[%c0_1, %c32_2, %c0_3], %0 {strides = array<i32>} : memref<6x64x1024xf32, #tpu.memory_space<vmem>>, vector<6x32x1024xf32>,
    %cst = arith.constant 0.000000e+00 : f32
    %2 = vector.broadcast %cst : f32 to vector<16x1024xf32>
    %c1 = arith.constant 1 : index
    %c0_4 = arith.constant 0 : index
    %c0_5 = arith.constant 0 : index
    %3 = vector.load %arg0[%c1, %c0_4, %c0_5] : memref<6x64x1024xf32, #tpu.memory_space<vmem>>, vector<5x16x1024xf32>
    %c0_6 = arith.constant 0 : index
    %c0_7 = arith.constant 0 : index
    %c0_8 = arith.constant 0 : index
    %4 = vector.load %arg1[%c0_6, %c0_7, %c0_8] : memref<6x64x1024xf32, #tpu.memory_space<vmem>>, vector<5x16x1024xf32>
    tpu.vector_store %arg1[%c0_6, %c0_7, %c0_8], %3 {strides = array<i32>} : memref<6x64x1024xf32, #tpu.memory_space<vmem>>, vector<5x16x1024xf32>,
    %c5 = arith.constant 5 : index
    %c0_9 = arith.constant 0 : index
    %c0_10 = arith.constant 0 : index
    %5 = vector.load %arg1[%c5, %c0_9, %c0_10] : memref<6x64x1024xf32, #tpu.memory_space<vmem>>, vector<1x16x1024xf32>
    %6 = vector.shape_cast %5 : vector<1x16x1024xf32> to vector<16x1024xf32>
    %7 = vector.shape_cast %2 : vector<16x1024xf32> to vector<1x16x1024xf32>
    tpu.vector_store %arg1[%c5, %c0_9, %c0_10], %7 {strides = array<i32>} : memref<6x64x1024xf32, #tpu.memory_space<vmem>>, vector<1x16x1024xf32>,
    %c0_11 = arith.constant 0 : index
    %c16 = arith.constant 16 : index
    %c0_12 = arith.constant 0 : index
    %8 = vector.load %arg0[%c0_11, %c16, %c0_12] : memref<6x64x1024xf32, #tpu.memory_space<vmem>>, vector<5x16x1024xf32>
    %c1_13 = arith.constant 1 : index
    %c16_14 = arith.constant 16 : index
    %c0_15 = arith.constant 0 : index
    %9 = vector.load %arg1[%c1_13, %c16_14, %c0_15] : memref<6x64x1024xf32, #tpu.memory_space<vmem>>, vector<5x16x1024xf32>
    tpu.vector_store %arg1[%c1_13, %c16_14, %c0_15], %8 {strides = array<i32>} : memref<6x64x1024xf32, #tpu.memory_space<vmem>>, vector<5x16x1024xf32>,
    %c0_16 = arith.constant 0 : index
    %c16_17 = arith.constant 16 : index
    %c0_18 = arith.constant 0 : index
    %10 = vector.load %arg1[%c0_16, %c16_17, %c0_18] : memref<6x64x1024xf32, #tpu.memory_space<vmem>>, vector<1x16x1024xf32>
    %11 = vector.shape_cast %10 : vector<1x16x1024xf32> to vector<16x1024xf32>
    %12 = vector.shape_cast %2 : vector<16x1024xf32> to vector<1x16x1024xf32>
    tpu.vector_store %arg1[%c0_16, %c16_17, %c0_18], %12 {strides = array<i32>} : memref<6x64x1024xf32, #tpu.memory_space<vmem>>, vector<1x16x1024xf32>,
    return
  }
}

</mosaic_0001>

<llo_original>
// kernel: up_block_forward.2
$region0: #{up_block_forward.2}
  #allocation0 [shape = 'u32[]', space=smem, size = 0x4, offset = 0x4, fixed_abs, tag = 'smem constant byte address 0x4 - core index']
  #allocation1 [shape = 'u32[144,128]{1,0:T(1,128)}', space=vmem, size = 0x12000, scoped, tag = 'internal scratch']
  %s0 = inlined_call_operand.vmem [shape: f32[6,288,256], index: 0, kind: input, shape index: {}]
  %s1 = inlined_call_operand.vmem [shape: f32[256,288], index: 1, kind: input, shape index: {}]
  %s2 = inlined_call_operand.vmem [shape: f32[256,1], index: 2, kind: input, shape index: {}]
  %s3 = inlined_call_operand.vmem [shape: f32[6,256,256], index: 3, kind: output, shape index: {}]
  %s4 = sld [smem:[#allocation0]]
  $region45: #{up_block_forward.2} parent=0
    _
  %s6 = ssub.s32 1, %s4
  %s7 = scalar_select 0, %s6, %s4
  loop: start=0, step=1, limit=8
  $region2: #{up_block_forward.2} parent=0 // loop_pre_header
    _
  $region3: #{up_block_forward.2} parent=0 // loop_header
    %s9 = sphi 0, %s13
    %p10 = scmp.ge.s32.totalorder %s9, 8
    %s19 = sphi 0, %s21
    %s22 = sphi 0, %s19
    %s23 = sphi 0, %s22
    %s39 = sphi 0, %s23
    %s43 = sphi 0, %s43
    %s45 = sphi 0, %s43
    %s46 = sphi 0, %s45
    %s60 = sphi 0, %s46
    %s64 = sphi 0, %s64
    %s66 = sphi 0, %s64
    %s67 = sphi 0, %s66
    %s81 = sphi 0, %s67
    %s87 = sphi 0, %s89
    %s90 = sphi 0, %s87
    %s91 = sphi 0, %s90
    %s107 = sphi 0, %s91
  $region4: #{up_block_forward.2} parent=0 // loop_header_branch
    %12 = sbr.rel (%p10) target = $region8
  $region5: #{up_block_forward.2} parent=0 // loop_body
    %s14 = ssub.s32 %s9, 1
    %s15 = ssub.s32 %s9, 2
    %s16 = sadd.s32 %s9, 1
    %s17 = ssub.s32 %s9, %s16
    %p18 = scmp.eq.s32.totalorder %s17, 0
    %s20 = sadd.s32 %s19, 1
    %s21 = scalar_select %p18, %s19, %s20
    %p24 = pneg %p18
    %p25 = scmp.eq.s32.totalorder %s9, 5
    %p26 = por %p24, %p25
    %p27 = scmp.ne.s32.totalorder %s19, %s22
    %p28 = scmp.eq.s32.totalorder %s9, 0
    %p29 = por %p27, %p28
    %p30 = scmp.ne.s32.totalorder %s19, %s22
    %p31 = scmp.eq.s32.totalorder %s14, 5
    %p32 = por %p30, %p31
    %p33 = scmp.ne.s32.totalorder %s22, %s23
    %p34 = scmp.eq.s32.totalorder %s14, 0
    %p35 = por %p33, %p34
    %p36 = scmp.ne.s32.totalorder %s22, %s23
    %p37 = scmp.eq.s32.totalorder %s15, 5
    %p38 = por %p36, %p37
    %p40 = scmp.ne.s32.totalorder %s23, %s39
    %p41 = scmp.eq.s32.totalorder %s15, 0
    %p42 = por %p40, %p41
    %s44 = sadd.s32 %s43, 1
    %p47 = scmp.eq.s32.totalorder %s9, 5
    %p48 = scmp.ne.s32.totalorder %s43, %s45
    %p49 = scmp.eq.s32.totalorder %s9, 0
    %p50 = por %p48, %p49
    %p51 = scmp.ne.s32.totalorder %s43, %s45
    %p52 = scmp.eq.s32.totalorder %s14, 5
    %p53 = por %p51, %p52
    %p54 = scmp.ne.s32.totalorder %s45, %s46
    %p55 = scmp.eq.s32.totalorder %s14, 0
    %p56 = por %p54, %p55
    %p57 = scmp.ne.s32.totalorder %s45, %s46
    %p58 = scmp.eq.s32.totalorder %s15, 5
    %p59 = por %p57, %p58
    %p61 = scmp.ne.s32.totalorder %s46, %s60
    %p62 = scmp.eq.s32.totalorder %s15, 0
    %p63 = por %p61, %p62
    %s65 = sadd.s32 %s64, 1
    %p68 = scmp.eq.s32.totalorder %s9, 5
    %p69 = scmp.ne.s32.totalorder %s64, %s66
    %p70 = scmp.eq.s32.totalorder %s9, 0
    %p71 = por %p69, %p70
    %p72 = scmp.ne.s32.totalorder %s64, %s66
    %p73 = scmp.eq.s32.totalorder %s14, 5
    %p74 = por %p72, %p73
    %p75 = scmp.ne.s32.totalorder %s66, %s67
    %p76 = scmp.eq.s32.totalorder %s14, 0
    %p77 = por %p75, %p76
    %p78 = scmp.ne.s32.totalorder %s66, %s67
    %p79 = scmp.eq.s32.totalorder %s15, 5
    %p80 = por %p78, %p79
    %p82 = scmp.ne.s32.totalorder %s67, %s81
    %p83 = scmp.eq.s32.totalorder %s15, 0
    %p84 = por %p82, %p83
    %s85 = ssub.s32 %s9, %s16
    %p86 = scmp.eq.s32.totalorder %s85, 0
    %s88 = sadd.s32 %s87, 1
    %s89 = scalar_select %p86, %s87, %s88
    %p92 = pneg %p86
    %p93 = scmp.eq.s32.totalorder %s9, 5
    %p94 = por %p92, %p93
    %p95 = scmp.ne.s32.totalorder %s87, %s90
    %p96 = scmp.eq.s32.totalorder %s9, 0
    %p97 = por %p95, %p96
    %p98 = scmp.ne.s32.totalorder %s87, %s90
    %p99 = scmp.eq.s32.totalorder %s14, 5
    %p100 = por %p98, %p99
    %p101 = scmp.ne.s32.totalorder %s90, %s91
    %p102 = scmp.eq.s32.totalorder %s14, 0
    %p103 = por %p101, %p102
    %p104 = scmp.ne.s32.totalorder %s90, %s91
    %p105 = scmp.eq.s32.totalorder %s15, 5
    %p106 = por %p104, %p105
    %p108 = scmp.ne.s32.totalorder %s91, %s107
    %p109 = scmp.eq.s32.totalorder %s15, 0
    %p110 = por %p108, %p109
    %p111 = scmp.le.s32.totalorder 1, %s9
    %p112 = scmp.lt.s32.totalorder %s9, 7
    %p113 = pnand %p111, %p112
    %p114 = pneg %p113
    // Predicated region
    $region9: #{up_block_forward.2} parent=5 // pred_check
      _
    $region10: #{up_block_forward.2} parent=5 // pred_check_branch
      %116 = sbr.rel (%p113) target = $region12
    $region11: #{up_block_forward.2} parent=5 // pred_region
      %s117 = ssub.s32 %s9, 1
      // Predicated region
      $region13: #{up_block_forward.2} parent=11 // pred_check
        %p118 = pneg %p56
      $region14: #{up_block_forward.2} parent=11 // pred_check_branch
        %120 = sbr.rel (%p118) target = $region16
      $region15: #{up_block_forward.2} parent=11 // pred_region
        _
      $region16: #{up_block_forward.2} parent=11 // pred_fallthru
        _
      // Predicated region
      $region17: #{up_block_forward.2} parent=11 // pred_check
        %p121 = pneg %p77
      $region18: #{up_block_forward.2} parent=11 // pred_check_branch
        %123 = sbr.rel (%p121) target = $region20
      $region19: #{up_block_forward.2} parent=11 // pred_region
        _
      $region20: #{up_block_forward.2} parent=11 // pred_fallthru
        _
    $region12: #{up_block_forward.2} parent=5 // pred_fallthru
      _
    %p124 = scmp.lt.s32.totalorder %s9, 6
    // Predicated region
    $region21: #{up_block_forward.2} parent=5 // pred_check
      %p125 = pneg %p124
    $region22: #{up_block_forward.2} parent=5 // pred_check_branch
      %127 = sbr.rel (%p125) target = $region24
    $region23: #{up_block_forward.2} parent=5 // pred_region
      // Predicated region
      $region25: #{up_block_forward.2} parent=23 // pred_check
        %p128 = pneg %p29
      $region26: #{up_block_forward.2} parent=23 // pred_check_branch
        %130 = sbr.rel (%p128) target = $region28
      $region27: #{up_block_forward.2} parent=23 // pred_region
        %p131 = scmp.lt.s32.totalorder %s9, 5
        %s132 = scalar_select %p131, %s9, 5
        %s133 = smul.addr %s132, 72
        %s134 = smul.addr %s133, 8
        %s135 = scalar_lea.vmem %s0, %s134
      $region28: #{up_block_forward.2} parent=23 // pred_fallthru
        _
    $region24: #{up_block_forward.2} parent=5 // pred_fallthru
      _
    %p136 = scmp.le.s32.totalorder 1, %s9
    %p137 = scmp.lt.s32.totalorder %s9, 7
    %p138 = pnand %p136, %p137
    %p139 = pneg %p138
    // Predicated region
    $region29: #{up_block_forward.2} parent=5 // pred_check
      _
    $region30: #{up_block_forward.2} parent=5 // pred_check_branch
      %141 = sbr.rel (%p138) target = $region32
    $region31: #{up_block_forward.2} parent=5 // pred_region
      %s142 = ssub.s32 %s9, 1
      %p143 = scmp.lt.s32.totalorder %s14, 5
      %s144 = scalar_select %p143, %s14, 5
      %s145 = smul.addr %s144, 72
      %s146 = smul.addr %s145, 8
      %s147 = scalar_lea.vmem %s0, %s146
      %p148 = pneg %p35
      %p149 = pneg %p32
      %p150 = pneg %p56
      %p151 = pneg %p53
      %p152 = pneg %p77
      %p153 = pneg %p74
      %p154 = pneg %p103
      %p155 = pneg %p100
      %p156 = scmp.lt.s32.totalorder %s14, 5
      %s157 = scalar_select %p156, %s14, 5
      %s158 = smul.addr %s157, 64
      %s159 = smul.addr %s158, 8
      %s160 = scalar_lea.vmem %s3, %s159
      %p161 = scmp.lt.s32.totalorder %s14, 5
      %s162 = scalar_select %p161, %s14, 5
      %s163 = smul.addr %s162, 72
      %s164 = smul.addr %s163, 8
      %s165 = scalar_lea.vmem %s0, %s164
      %p166 = scmp.lt.s32.totalorder %s14, 5
      %s167 = scalar_select %p166, %s14, 5
      %s168 = smul.addr %s167, 64
      %s169 = smul.addr %s168, 8
      %s170 = scalar_lea.vmem %s3, %s169
      %v171 = vld [vmem:[%s1] sm:$0xff]
      %v172 = vld [vmem:[%s1 + $0x8] sm:$0xff]
      %v173 = vld [vmem:[%s1 + $0x10] sm:$0xff]
      %v174 = vld [vmem:[%s1 + $0x18] sm:$0xff]
      %v175 = vld [vmem:[%s1 + $0x20] sm:$0xff]
      %v176 = vld [vmem:[%s1 + $0x28] sm:$0xff]
      %v177 = vld [vmem:[%s1 + $0x30] sm:$0xff]
      %v178 = vld [vmem:[%s1 + $0x38] sm:$0xff]
      %v179 = vld [vmem:[%s1 + $0x40] sm:$0xff]
      %v180 = vld [vmem:[%s1 + $0x48] sm:$0xff]
      %v181 = vld [vmem:[%s1 + $0x50] sm:$0xff]
      %v182 = vld [vmem:[%s1 + $0x58] sm:$0xff]
      %v183 = vld [vmem:[%s1 + $0x60] sm:$0xff]
      %v184 = vld [vmem:[%s1 + $0x68] sm:$0xff]
      %v185 = vld [vmem:[%s1 + $0x70] sm:$0xff]
      %v186 = vld [vmem:[%s1 + $0x78] sm:$0xff]
      %v187 = vld [vmem:[%s1 + $0x80] sm:$0xff]
      %v188 = vld [vmem:[%s1 + $0x88] sm:$0xff]
      %v189 = vld [vmem:[%s1 + $0x90] sm:$0xff]
      %v190 = vld [vmem:[%s1 + $0x98] sm:$0xff]
      %v191 = vld [vmem:[%s1 + $0xa0] sm:$0xff]
      %v192 = vld [vmem:[%s1 + $0xa8] sm:$0xff]
      %v193 = vld [vmem:[%s1 + $0xb0] sm:$0xff]
      %v194 = vld [vmem:[%s1 + $0xb8] sm:$0xff]
      %v195 = vld [vmem:[%s1 + $0xc0] sm:$0xff]
      %v196 = vld [vmem:[%s1 + $0xc8] sm:$0xff]
      %v197 = vld [vmem:[%s1 + $0xd0] sm:$0xff]
      %v198 = vld [vmem:[%s1 + $0xd8] sm:$0xff]
      %v199 = vld [vmem:[%s1 + $0xe0] sm:$0xff]
      %v200 = vld [vmem:[%s1 + $0xe8] sm:$0xff]
      %v201 = vld [vmem:[%s1 + $0xf0] sm:$0xff]
      %v202 = vld [vmem:[%s1 + $0xf8] sm:$0xff]
      %v203 = vld [vmem:[%s1 + $0x100] sm:$0xff]
      %v204 = vld [vmem:[%s1 + $0x108] sm:$0xff]
      %v205 = vld [vmem:[%s1 + $0x110] sm:$0xff]
      %v206 = vld [vmem:[%s1 + $0x118] sm:$0xff]
      %v207 = vld [vmem:[%s1 + $0x120] sm:$0xff]
      %v208 = vld [vmem:[%s1 + $0x128] sm:$0xff]
      %v209 = vld [vmem:[%s1 + $0x130] sm:$0xff]
      %v210 = vld [vmem:[%s1 + $0x138] sm:$0xff]
      %v211 = vld [vmem:[%s1 + $0x140] sm:$0xff]
      %v212 = vld [vmem:[%s1 + $0x148] sm:$0xff]
      %v213 = vld [vmem:[%s1 + $0x150] sm:$0xff]
      %v214 = vld [vmem:[%s1 + $0x158] sm:$0xff]
      %v215 = vld [vmem:[%s1 + $0x160] sm:$0xff]
      %v216 = vld [vmem:[%s1 + $0x168] sm:$0xff]
      %v217 = vld [vmem:[%s1 + $0x170] sm:$0xff]
      %v218 = vld [vmem:[%s1 + $0x178] sm:$0xff]
      %v219 = vld [vmem:[%s1 + $0x180] sm:$0xff]
      %v220 = vld [vmem:[%s1 + $0x188] sm:$0xff]
      %v221 = vld [vmem:[%s1 + $0x190] sm:$0xff]
      %v222 = vld [vmem:[%s1 + $0x198] sm:$0xff]
      %v223 = vld [vmem:[%s1 + $0x1a0] sm:$0xff]
      %v224 = vld [vmem:[%s1 + $0x1a8] sm:$0xff]
      %v225 = vld [vmem:[%s1 + $0x1b0] sm:$0xff]
      %v226 = vld [vmem:[%s1 + $0x1b8] sm:$0xff]
      %v227 = vld [vmem:[%s1 + $0x1c0] sm:$0xff]
      %v228 = vld [vmem:[%s1 + $0x1c8] sm:$0xff]
      %v229 = vld [vmem:[%s1 + $0x1d0] sm:$0xff]
      %v230 = vld [vmem:[%s1 + $0x1d8] sm:$0xff]
      %v231 = vld [vmem:[%s1 + $0x1e0] sm:$0xff]
      %v232 = vld [vmem:[%s1 + $0x1e8] sm:$0xff]
      %v233 = vld [vmem:[%s1 + $0x1f0] sm:$0xff]
      %v234 = vld [vmem:[%s1 + $0x1f8] sm:$0xff]
      %v235 = vld [vmem:[%s1 + $0x200] sm:$0xff]
      %v236 = vld [vmem:[%s1 + $0x208] sm:$0xff]
      %v237 = vld [vmem:[%s1 + $0x210] sm:$0xff]
      %v238 = vld [vmem:[%s1 + $0x218] sm:$0xff]
      %v239 = vld [vmem:[%s1 + $0x220] sm:$0xff]
      %v240 = vld [vmem:[%s1 + $0x228] sm:$0xff]
      %v241 = vld [vmem:[%s1 + $0x230] sm:$0xff]
      %v242 = vld [vmem:[%s1 + $0x238] sm:$0xff]
      %v243 = vld [vmem:[%s1 + $0x240] sm:$0xff]
      %v244 = vld [vmem:[%s1 + $0x248] sm:$0xff]
      %v245 = vld [vmem:[%s1 + $0x250] sm:$0xff]
      %v246 = vld [vmem:[%s1 + $0x258] sm:$0xff]
      %v247 = vld [vmem:[%s1 + $0x260] sm:$0xff]
      %v248 = vld [vmem:[%s1 + $0x268] sm:$0xff]
      %v249 = vld [vmem:[%s1 + $0x270] sm:$0xff]
      %v250 = vld [vmem:[%s1 + $0x278] sm:$0xff]
      %v251 = vld [vmem:[%s1 + $0x280] sm:$0xff]
      %v252 = vld [vmem:[%s1 + $0x288] sm:$0xff]
      %v253 = vld [vmem:[%s1 + $0x290] sm:$0xff]
      %v254 = vld [vmem:[%s1 + $0x298] sm:$0xff]
      %v255 = vld [vmem:[%s1 + $0x2a0] sm:$0xff]
      %v256 = vld [vmem:[%s1 + $0x2a8] sm:$0xff]
      %v257 = vld [vmem:[%s1 + $0x2b0] sm:$0xff]
      %v258 = vld [vmem:[%s1 + $0x2b8] sm:$0xff]
      %v259 = vld [vmem:[%s1 + $0x2c0] sm:$0xff]
      %v260 = vld [vmem:[%s1 + $0x2c8] sm:$0xff]
      %v261 = vld [vmem:[%s1 + $0x2d0] sm:$0xff]
      %v262 = vld [vmem:[%s1 + $0x2d8] sm:$0xff]
      %v263 = vld [vmem:[%s1 + $0x2e0] sm:$0xff]
      %v264 = vld [vmem:[%s1 + $0x2e8] sm:$0xff]
      %v265 = vld [vmem:[%s1 + $0x2f0] sm:$0xff]
      %v266 = vld [vmem:[%s1 + $0x2f8] sm:$0xff]
      %v267 = vld [vmem:[%s165] sm:$0xff]
      %v268 = vld [vmem:[%s165 + $0x8] sm:$0xff]
      %v269 = vld [vmem:[%s165 + $0x10] sm:$0xff]
      %v270 = vld [vmem:[%s165 + $0x18] sm:$0xff]
      %v271 = vld [vmem:[%s165 + $0x20] sm:$0xff]
      %v272 = vld [vmem:[%s165 + $0x28] sm:$0xff]
      %v273 = vld [vmem:[%s165 + $0x30] sm:$0xff]
      %v274 = vld [vmem:[%s165 + $0x38] sm:$0xff]
      %v275 = vld [vmem:[%s165 + $0x40] sm:$0xff]
      %v276 = vld [vmem:[%s165 + $0x48] sm:$0xff]
      %v277 = vld [vmem:[%s165 + $0x50] sm:$0xff]
      %v278 = vld [vmem:[%s165 + $0x58] sm:$0xff]
      %v279 = vld [vmem:[%s165 + $0x60] sm:$0xff]
      %v280 = vld [vmem:[%s165 + $0x68] sm:$0xff]
      %v281 = vld [vmem:[%s165 + $0x70] sm:$0xff]
      %v282 = vld [vmem:[%s165 + $0x78] sm:$0xff]
      %v283 = vld [vmem:[%s165 + $0x80] sm:$0xff]
      %v284 = vld [vmem:[%s165 + $0x88] sm:$0xff]
      %v285 = vld [vmem:[%s165 + $0x90] sm:$0xff]
      %v286 = vld [vmem:[%s165 + $0x98] sm:$0xff]
      %v287 = vld [vmem:[%s165 + $0xa0] sm:$0xff]
      %v288 = vld [vmem:[%s165 + $0xa8] sm:$0xff]
      %v289 = vld [vmem:[%s165 + $0xb0] sm:$0xff]
      %v290 = vld [vmem:[%s165 + $0xb8] sm:$0xff]
      %v291 = vld [vmem:[%s165 + $0xc0] sm:$0xff]
      %v292 = vld [vmem:[%s165 + $0xc8] sm:$0xff]
      %v293 = vld [vmem:[%s165 + $0xd0] sm:$0xff]
      %v294 = vld [vmem:[%s165 + $0xd8] sm:$0xff]
      %v295 = vld [vmem:[%s165 + $0xe0] sm:$0xff]
      %v296 = vld [vmem:[%s165 + $0xe8] sm:$0xff]
      %v297 = vld [vmem:[%s165 + $0xf0] sm:$0xff]
      %v298 = vld [vmem:[%s165 + $0xf8] sm:$0xff]
      %v299 = vld [vmem:[%s165 + $0x100] sm:$0xff]
      %v300 = vld [vmem:[%s165 + $0x108] sm:$0xff]
      %v301 = vld [vmem:[%s165 + $0x110] sm:$0xff]
      %v302 = vld [vmem:[%s165 + $0x118] sm:$0xff]
      %v303 = vld [vmem:[%s165 + $0x120] sm:$0xff]
      %v304 = vld [vmem:[%s165 + $0x128] sm:$0xff]
      %v305 = vld [vmem:[%s165 + $0x130] sm:$0xff]
      %v306 = vld [vmem:[%s165 + $0x138] sm:$0xff]
      %v307 = vld [vmem:[%s165 + $0x140] sm:$0xff]
      %v308 = vld [vmem:[%s165 + $0x148] sm:$0xff]
      %v309 = vld [vmem:[%s165 + $0x150] sm:$0xff]
      %v310 = vld [vmem:[%s165 + $0x158] sm:$0xff]
      %v311 = vld [vmem:[%s165 + $0x160] sm:$0xff]
      %v312 = vld [vmem:[%s165 + $0x168] sm:$0xff]
      %v313 = vld [vmem:[%s165 + $0x170] sm:$0xff]
      %v314 = vld [vmem:[%s165 + $0x178] sm:$0xff]
      %v315 = vld [vmem:[%s165 + $0x180] sm:$0xff]
      %v316 = vld [vmem:[%s165 + $0x188] sm:$0xff]
      %v317 = vld [vmem:[%s165 + $0x190] sm:$0xff]
      %v318 = vld [vmem:[%s165 + $0x198] sm:$0xff]
      %v319 = vld [vmem:[%s165 + $0x1a0] sm:$0xff]
      %v320 = vld [vmem:[%s165 + $0x1a8] sm:$0xff]
      %v321 = vld [vmem:[%s165 + $0x1b0] sm:$0xff]
      %v322 = vld [vmem:[%s165 + $0x1b8] sm:$0xff]
      %v323 = vld [vmem:[%s165 + $0x1c0] sm:$0xff]
      %v324 = vld [vmem:[%s165 + $0x1c8] sm:$0xff]
      %v325 = vld [vmem:[%s165 + $0x1d0] sm:$0xff]
      %v326 = vld [vmem:[%s165 + $0x1d8] sm:$0xff]
      %v327 = vld [vmem:[%s165 + $0x1e0] sm:$0xff]
      %v328 = vld [vmem:[%s165 + $0x1e8] sm:$0xff]
      %v329 = vld [vmem:[%s165 + $0x1f0] sm:$0xff]
      %v330 = vld [vmem:[%s165 + $0x1f8] sm:$0xff]
      %v331 = vld [vmem:[%s165 + $0x200] sm:$0xff]
      %v332 = vld [vmem:[%s165 + $0x208] sm:$0xff]
      %v333 = vld [vmem:[%s165 + $0x210] sm:$0xff]
      %v334 = vld [vmem:[%s165 + $0x218] sm:$0xff]
      %v335 = vld [vmem:[%s165 + $0x220] sm:$0xff]
      %v336 = vld [vmem:[%s165 + $0x228] sm:$0xff]
      %v337 = vld [vmem:[%s165 + $0x230] sm:$0xff]
      %v338 = vld [vmem:[%s165 + $0x238] sm:$0xff]
      %v339 = vld [vmem:[%s2] sm:$0xff]
      %v340 = vld [vmem:[%s2 + $0x8] sm:$0xff]
      %v341 = vld [vmem:[%s2 + $0x10] sm:$0xff]
      %v342 = vld [vmem:[%s2 + $0x18] sm:$0xff]
      %v343 = vld [vmem:[%s2 + $0x20] sm:$0xff]
      %v344 = vld [vmem:[%s2 + $0x28] sm:$0xff]
      %v345 = vld [vmem:[%s2 + $0x30] sm:$0xff]
      %v346 = vld [vmem:[%s2 + $0x38] sm:$0xff]
      %v347 = vld [vmem:[%s2 + $0x40] sm:$0xff]
      %v348 = vld [vmem:[%s2 + $0x48] sm:$0xff]
      %v349 = vld [vmem:[%s2 + $0x50] sm:$0xff]
      %v350 = vld [vmem:[%s2 + $0x58] sm:$0xff]
      %v351 = vld [vmem:[%s2 + $0x60] sm:$0xff]
      %v352 = vld [vmem:[%s2 + $0x68] sm:$0xff]
      %v353 = vld [vmem:[%s2 + $0x70] sm:$0xff]
      %v354 = vld [vmem:[%s2 + $0x78] sm:$0xff]
      %v355 = vld [vmem:[%s2 + $0x80] sm:$0xff]
      %v356 = vld [vmem:[%s2 + $0x88] sm:$0xff]
      %v357 = vld [vmem:[%s2 + $0x90] sm:$0xff]
      %v358 = vld [vmem:[%s2 + $0x98] sm:$0xff]
      %v359 = vld [vmem:[%s2 + $0xa0] sm:$0xff]
      %v360 = vld [vmem:[%s2 + $0xa8] sm:$0xff]
      %v361 = vld [vmem:[%s2 + $0xb0] sm:$0xff]
      %v362 = vld [vmem:[%s2 + $0xb8] sm:$0xff]
      %v363 = vld [vmem:[%s2 + $0xc0] sm:$0xff]
      %v364 = vld [vmem:[%s2 + $0xc8] sm:$0xff]
      %v365 = vld [vmem:[%s2 + $0xd0] sm:$0xff]
      %v366 = vld [vmem:[%s2 + $0xd8] sm:$0xff]
      %v367 = vld [vmem:[%s2 + $0xe0] sm:$0xff]
      %v368 = vld [vmem:[%s2 + $0xe8] sm:$0xff]
      %v369 = vld [vmem:[%s2 + $0xf0] sm:$0xff]
      %v370 = vld [vmem:[%s2 + $0xf8] sm:$0xff]
      %372 = vset.pattern.permute.xlu0 0
      %373 = vperm.xlu0 %372, %v339
      %v374 = vpop.permute.xlu0 %373
      %377 = vset.pattern.permute.xlu0 0
      %378 = vperm.xlu0 %377, %v340
      %v379 = vpop.permute.xlu0 %378
      %382 = vset.pattern.permute.xlu0 0
      %383 = vperm.xlu0 %382, %v341
      %v384 = vpop.permute.xlu0 %383
      %387 = vset.pattern.permute.xlu0 0
      %388 = vperm.xlu0 %387, %v342
      %v389 = vpop.permute.xlu0 %388
      %392 = vset.pattern.permute.xlu0 0
      %393 = vperm.xlu0 %392, %v343
      %v394 = vpop.permute.xlu0 %393
      %397 = vset.pattern.permute.xlu0 0
      %398 = vperm.xlu0 %397, %v344
      %v399 = vpop.permute.xlu0 %398
      %402 = vset.pattern.permute.xlu0 0
      %403 = vperm.xlu0 %402, %v345
      %v404 = vpop.permute.xlu0 %403
      %407 = vset.pattern.permute.xlu0 0
      %408 = vperm.xlu0 %407, %v346
      %v409 = vpop.permute.xlu0 %408
      %412 = vset.pattern.permute.xlu0 0
      %413 = vperm.xlu0 %412, %v347
      %v414 = vpop.permute.xlu0 %413
      %417 = vset.pattern.permute.xlu0 0
      %418 = vperm.xlu0 %417, %v348
      %v419 = vpop.permute.xlu0 %418
      %422 = vset.pattern.permute.xlu0 0
      %423 = vperm.xlu0 %422, %v349
      %v424 = vpop.permute.xlu0 %423
      %427 = vset.pattern.permute.xlu0 0
      %428 = vperm.xlu0 %427, %v350
      %v429 = vpop.permute.xlu0 %428
      %432 = vset.pattern.permute.xlu0 0
      %433 = vperm.xlu0 %432, %v351
      %v434 = vpop.permute.xlu0 %433
      %437 = vset.pattern.permute.xlu0 0
      %438 = vperm.xlu0 %437, %v352
      %v439 = vpop.permute.xlu0 %438
      %442 = vset.pattern.permute.xlu0 0
      %443 = vperm.xlu0 %442, %v353
      %v444 = vpop.permute.xlu0 %443
      %447 = vset.pattern.permute.xlu0 0
      %448 = vperm.xlu0 %447, %v354
      %v449 = vpop.permute.xlu0 %448
      %452 = vset.pattern.permute.xlu0 0
      %453 = vperm.xlu0 %452, %v355
      %v454 = vpop.permute.xlu0 %453
      %457 = vset.pattern.permute.xlu0 0
      %458 = vperm.xlu0 %457, %v356
      %v459 = vpop.permute.xlu0 %458
      %462 = vset.pattern.permute.xlu0 0
      %463 = vperm.xlu0 %462, %v357
      %v464 = vpop.permute.xlu0 %463
      %467 = vset.pattern.permute.xlu0 0
      %468 = vperm.xlu0 %467, %v358
      %v469 = vpop.permute.xlu0 %468
      %472 = vset.pattern.permute.xlu0 0
      %473 = vperm.xlu0 %472, %v359
      %v474 = vpop.permute.xlu0 %473
      %477 = vset.pattern.permute.xlu0 0
      %478 = vperm.xlu0 %477, %v360
      %v479 = vpop.permute.xlu0 %478
      %482 = vset.pattern.permute.xlu0 0
      %483 = vperm.xlu0 %482, %v361
      %v484 = vpop.permute.xlu0 %483
      %487 = vset.pattern.permute.xlu0 0
      %488 = vperm.xlu0 %487, %v362
      %v489 = vpop.permute.xlu0 %488
      %492 = vset.pattern.permute.xlu0 0
      %493 = vperm.xlu0 %492, %v363
      %v494 = vpop.permute.xlu0 %493
      %497 = vset.pattern.permute.xlu0 0
      %498 = vperm.xlu0 %497, %v364
      %v499 = vpop.permute.xlu0 %498
      %502 = vset.pattern.permute.xlu0 0
      %503 = vperm.xlu0 %502, %v365
      %v504 = vpop.permute.xlu0 %503
      %507 = vset.pattern.permute.xlu0 0
      %508 = vperm.xlu0 %507, %v366
      %v509 = vpop.permute.xlu0 %508
      %512 = vset.pattern.permute.xlu0 0
      %513 = vperm.xlu0 %512, %v367
      %v514 = vpop.permute.xlu0 %513
      %517 = vset.pattern.permute.xlu0 0
      %518 = vperm.xlu0 %517, %v368
      %v519 = vpop.permute.xlu0 %518
      %522 = vset.pattern.permute.xlu0 0
      %523 = vperm.xlu0 %522, %v369
      %v524 = vpop.permute.xlu0 %523
      %527 = vset.pattern.permute.xlu0 0
      %528 = vperm.xlu0 %527, %v370
      %v529 = vpop.permute.xlu0 %528
      %vm531 = vcmask 261120
      %v533 = vsel %vm531, %v173, 0
      %v536 = vsel %vm531, %v176, 0
      %v539 = vsel %vm531, %v179, 0
      %v542 = vsel %vm531, %v182, 0
      %v545 = vsel %vm531, %v185, 0
      %v548 = vsel %vm531, %v188, 0
      %v551 = vsel %vm531, %v191, 0
      %v554 = vsel %vm531, %v194, 0
      %v557 = vsel %vm531, %v197, 0
      %v560 = vsel %vm531, %v200, 0
      %v563 = vsel %vm531, %v203, 0
      %v566 = vsel %vm531, %v206, 0
      %v569 = vsel %vm531, %v209, 0
      %v572 = vsel %vm531, %v212, 0
      %v575 = vsel %vm531, %v215, 0
      %v578 = vsel %vm531, %v218, 0
      %v581 = vsel %vm531, %v221, 0
      %v584 = vsel %vm531, %v224, 0
      %v587 = vsel %vm531, %v227, 0
      %v590 = vsel %vm531, %v230, 0
      %v593 = vsel %vm531, %v233, 0
      %v596 = vsel %vm531, %v236, 0
      %v599 = vsel %vm531, %v239, 0
      %v602 = vsel %vm531, %v242, 0
      %v605 = vsel %vm531, %v245, 0
      %v608 = vsel %vm531, %v248, 0
      %v611 = vsel %vm531, %v251, 0
      %v614 = vsel %vm531, %v254, 0
      %v617 = vsel %vm531, %v257, 0
      %v620 = vsel %vm531, %v260, 0
      %v623 = vsel %vm531, %v263, 0
      %v626 = vsel %vm531, %v266, 0
      %628 = vmatprep.subr.mxu0 %v268
      %629 = vmatpush1.msra.mxu0 %v267
      %630 = vmatprep.subr.mxu0 %v270
      %631 = vmatpush1.msra.mxu0 %v269
      %632 = vmatprep.subr.mxu0 %v272
      %633 = vmatpush1.msra.mxu0 %v271
      %634 = vmatprep.subr.mxu0 %v274
      %635 = vmatpush1.msra.mxu0 %v273
      %636 = vmatprep.subr.mxu0 %v276
      %637 = vmatpush1.msra.mxu0 %v275
      %638 = vmatprep.subr.mxu0 %v278
      %639 = vmatpush1.msra.mxu0 %v277
      %640 = vmatprep.subr.mxu0 %v280
      %641 = vmatpush1.msra.mxu0 %v279
      %642 = vmatprep.subr.mxu0 %v282
      %643 = vmatpush1.msra.mxu0 %v281
      %644 = vmatprep.subr.mxu0 %v284
      %645 = vmatpush1.msra.mxu0 %v283
      %646 = vmatprep.subr.mxu0 %v286
      %647 = vmatpush1.msra.mxu0 %v285
      %648 = vmatprep.subr.mxu0 %v288
      %649 = vmatpush1.msra.mxu0 %v287
      %650 = vmatprep.subr.mxu0 %v290
      %651 = vmatpush1.msra.mxu0 %v289
      %652 = vmatprep.subr.mxu0 %v292
      %653 = vmatpush1.msra.mxu0 %v291
      %654 = vmatprep.subr.mxu0 %v294
      %655 = vmatpush1.msra.mxu0 %v293
      %656 = vmatprep.subr.mxu0 %v296
      %657 = vmatpush1.msra.mxu0 %v295
      %658 = vmatprep.subr.mxu0 %v298
      %659 = vmatpush1.msra.mxu0 %v297
      %660 = vmatprep.subr.mxu0 %v300
      %661 = vmatpush1.msra.mxu0 %v299
      %662 = vmatprep.subr.mxu0 %v302
      %663 = vmatpush1.msra.mxu0 %v301
      %664 = vmatprep.subr.mxu0 %v304
      %665 = vmatpush1.msra.mxu0 %v303
      %666 = vmatprep.subr.mxu0 %v306
      %667 = vmatpush1.msra.mxu0 %v305
      %668 = vmatprep.subr.mxu0 %v308
      %669 = vmatpush1.msra.mxu0 %v307
      %670 = vmatprep.subr.mxu0 %v310
      %671 = vmatpush1.msra.mxu0 %v309
      %672 = vmatprep.subr.mxu0 %v312
      %673 = vmatpush1.msra.mxu0 %v311
      %674 = vmatprep.subr.mxu0 %v314
      %675 = vmatpush1.msra.mxu0 %v313
      %676 = vmatprep.subr.mxu0 %v316
      %677 = vmatpush1.msra.mxu0 %v315
      %678 = vmatprep.subr.mxu0 %v318
      %679 = vmatpush1.msra.mxu0 %v317
      %680 = vmatprep.subr.mxu0 %v320
      %681 = vmatpush1.msra.mxu0 %v319
      %682 = vmatprep.subr.mxu0 %v322
      %683 = vmatpush1.msra.mxu0 %v321
      %684 = vmatprep.subr.mxu0 %v324
      %685 = vmatpush1.msra.mxu0 %v323
      %686 = vmatprep.subr.mxu0 %v326
      %687 = vmatpush1.msra.mxu0 %v325
      %688 = vmatprep.subr.mxu0 %v328
      %689 = vmatpush1.msra.mxu0 %v327
      %690 = vmatprep.subr.mxu0 %v330
      %691 = vmatpush1.msra.mxu0 %v329
      %692 = vmatprep.mubr.f32.mxu0 %v172
      %693 = vmatmul.mubr.f32.gmra.mrb[0].mxu0 %v171
      %v694 = vpop.f32.mrb[0].mxu0
      %v695 = vadd.f32 %v374, %v694
      %v696 = vpop.f32.mrb[0].mxu0
      %v697 = vadd.f32 %v374, %v696
      %698 = vmatprep.mubr.f32.mxu0 %v175
      %699 = vmatmul.mubr.f32.gmra.mrb[0].mxu0 %v174
      %v700 = vpop.f32.mrb[0].mxu0
      %v701 = vadd.f32 %v379, %v700
      %v702 = vpop.f32.mrb[0].mxu0
      %v703 = vadd.f32 %v379, %v702
      %704 = vmatprep.mubr.f32.mxu0 %v178
      %705 = vmatmul.mubr.f32.gmra.mrb[0].mxu0 %v177
      %v706 = vpop.f32.mrb[0].mxu0
      %v707 = vadd.f32 %v384, %v706
      %v708 = vpop.f32.mrb[0].mxu0
      %v709 = vadd.f32 %v384, %v708
      %710 = vmatprep.mubr.f32.mxu0 %v181
      %711 = vmatmul.mubr.f32.gmra.mrb[0].mxu0 %v180
      %v712 = vpop.f32.mrb[0].mxu0
      %v713 = vadd.f32 %v389, %v712
      %v714 = vpop.f32.mrb[0].mxu0
      %v715 = vadd.f32 %v389, %v714
      %716 = vmatprep.mubr.f32.mxu0 %v184
      %717 = vmatmul.mubr.f32.gmra.mrb[0].mxu0 %v183
      %v718 = vpop.f32.mrb[0].mxu0
      %v719 = vadd.f32 %v394, %v718
      %v720 = vpop.f32.mrb[0].mxu0
      %v721 = vadd.f32 %v394, %v720
      %722 = vmatprep.mubr.f32.mxu0 %v187
      %723 = vmatmul.mubr.f32.gmra.mrb[0].mxu0 %v186
      %v724 = vpop.f32.mrb[0].mxu0
      %v725 = vadd.f32 %v399, %v724
      %v726 = vpop.f32.mrb[0].mxu0
      %v727 = vadd.f32 %v399, %v726
      %728 = vmatprep.mubr.f32.mxu0 %v190
      %729 = vmatmul.mubr.f32.gmra.mrb[0].mxu0 %v189
      %v730 = vpop.f32.mrb[0].mxu0
      %v731 = vadd.f32 %v404, %v730
      %v732 = vpop.f32.mrb[0].mxu0
      %v733 = vadd.f32 %v404, %v732
      %734 = vmatprep.mubr.f32.mxu0 %v193
      %735 = vmatmul.mubr.f32.gmra.mrb[0].mxu0 %v192
      %v736 = vpop.f32.mrb[0].mxu0
      %v737 = vadd.f32 %v409, %v736
      %v738 = vpop.f32.mrb[0].mxu0
      %v739 = vadd.f32 %v409, %v738
      %740 = vmatprep.mubr.f32.mxu0 %v196
      %741 = vmatmul.mubr.f32.gmra.mrb[0].mxu0 %v195
      %v742 = vpop.f32.mrb[0].mxu0
      %v743 = vadd.f32 %v414, %v742
      %v744 = vpop.f32.mrb[0].mxu0
      %v745 = vadd.f32 %v414, %v744
      %746 = vmatprep.mubr.f32.mxu0 %v199
      %747 = vmatmul.mubr.f32.gmra.mrb[0].mxu0 %v198
      %v748 = vpop.f32.mrb[0].mxu0
      %v749 = vadd.f32 %v419, %v748
      %v750 = vpop.f32.mrb[0].mxu0
      %v751 = vadd.f32 %v419, %v750
      %752 = vmatprep.mubr.f32.mxu0 %v202
      %753 = vmatmul.mubr.f32.gmra.mrb[0].mxu0 %v201
      %v754 = vpop.f32.mrb[0].mxu0
      %v755 = vadd.f32 %v424, %v754
      %v756 = vpop.f32.mrb[0].mxu0
      %v757 = vadd.f32 %v424, %v756
      %758 = vmatprep.mubr.f32.mxu0 %v205
      %759 = vmatmul.mubr.f32.gmra.mrb[0].mxu0 %v204
      %v760 = vpop.f32.mrb[0].mxu0
      %v761 = vadd.f32 %v429, %v760
      %v762 = vpop.f32.mrb[0].mxu0
      %v763 = vadd.f32 %v429, %v762
      %764 = vmatprep.mubr.f32.mxu0 %v208
      %765 = vmatmul.mubr.f32.gmra.mrb[0].mxu0 %v207
      %v766 = vpop.f32.mrb[0].mxu0
      %v767 = vadd.f32 %v434, %v766
      %v768 = vpop.f32.mrb[0].mxu0
      %v769 = vadd.f32 %v434, %v768
      %770 = vmatprep.mubr.f32.mxu0 %v211
      %771 = vmatmul.mubr.f32.gmra.mrb[0].mxu0 %v210
      %v772 = vpop.f32.mrb[0].mxu0
      %v773 = vadd.f32 %v439, %v772
      %v774 = vpop.f32.mrb[0].mxu0
      %v775 = vadd.f32 %v439, %v774
      %776 = vmatprep.mubr.f32.mxu0 %v214
      %777 = vmatmul.mubr.f32.gmra.mrb[0].mxu0 %v213
      %v778 = vpop.f32.mrb[0].mxu0
      %v779 = vadd.f32 %v444, %v778
      %v780 = vpop.f32.mrb[0].mxu0
      %v781 = vadd.f32 %v444, %v780
      %782 = vmatprep.mubr.f32.mxu0 %v217
      %783 = vmatmul.mubr.f32.gmra.mrb[0].mxu0 %v216
      %v784 = vpop.f32.mrb[0].mxu0
      %v785 = vadd.f32 %v449, %v784
      %v786 = vpop.f32.mrb[0].mxu0
      %v787 = vadd.f32 %v449, %v786
      %788 = vmatprep.mubr.f32.mxu0 %v220
      %789 = vmatmul.mubr.f32.gmra.mrb[0].mxu0 %v219
      %v790 = vpop.f32.mrb[0].mxu0
      %v791 = vadd.f32 %v454, %v790
      %v792 = vpop.f32.mrb[0].mxu0
      %v793 = vadd.f32 %v454, %v792
      %794 = vmatprep.mubr.f32.mxu0 %v223
      %795 = vmatmul.mubr.f32.gmra.mrb[0].mxu0 %v222
      %v796 = vpop.f32.mrb[0].mxu0
      %v797 = vadd.f32 %v459, %v796
      %v798 = vpop.f32.mrb[0].mxu0
      %v799 = vadd.f32 %v459, %v798
      %800 = vmatprep.mubr.f32.mxu0 %v226
      %801 = vmatmul.mubr.f32.gmra.mrb[0].mxu0 %v225
      %v802 = vpop.f32.mrb[0].mxu0
      %v803 = vadd.f32 %v464, %v802
      %v804 = vpop.f32.mrb[0].mxu0
      %v805 = vadd.f32 %v464, %v804
      %806 = vmatprep.mubr.f32.mxu0 %v229
      %807 = vmatmul.mubr.f32.gmra.mrb[0].mxu0 %v228
      %v808 = vpop.f32.mrb[0].mxu0
      %v809 = vadd.f32 %v469, %v808
      %v810 = vpop.f32.mrb[0].mxu0
      %v811 = vadd.f32 %v469, %v810
      %812 = vmatprep.mubr.f32.mxu0 %v232
      %813 = vmatmul.mubr.f32.gmra.mrb[0].mxu0 %v231
      %v814 = vpop.f32.mrb[0].mxu0
      %v815 = vadd.f32 %v474, %v814
      %v816 = vpop.f32.mrb[0].mxu0
      %v817 = vadd.f32 %v474, %v816
      %818 = vmatprep.mubr.f32.mxu0 %v235
      %819 = vmatmul.mubr.f32.gmra.mrb[0].mxu0 %v234
      %v820 = vpop.f32.mrb[0].mxu0
      %v821 = vadd.f32 %v479, %v820
      %v822 = vpop.f32.mrb[0].mxu0
      %v823 = vadd.f32 %v479, %v822
      %824 = vmatprep.mubr.f32.mxu0 %v238
      %825 = vmatmul.mubr.f32.gmra.mrb[0].mxu0 %v237
      %v826 = vpop.f32.mrb[0].mxu0
      %v827 = vadd.f32 %v484, %v826
      %v828 = vpop.f32.mrb[0].mxu0
      %v829 = vadd.f32 %v484, %v828
      %830 = vmatprep.mubr.f32.mxu0 %v241
      %831 = vmatmul.mubr.f32.gmra.mrb[0].mxu0 %v240
      %v832 = vpop.f32.mrb[0].mxu0
      %v833 = vadd.f32 %v489, %v832
      %v834 = vpop.f32.mrb[0].mxu0
      %v835 = vadd.f32 %v489, %v834
      %836 = vmatprep.mubr.f32.mxu0 %v244
      %837 = vmatmul.mubr.f32.gmra.mrb[0].mxu0 %v243
      %v838 = vpop.f32.mrb[0].mxu0
      %v839 = vadd.f32 %v494, %v838
      %v840 = vpop.f32.mrb[0].mxu0
      %v841 = vadd.f32 %v494, %v840
      %842 = vmatprep.mubr.f32.mxu0 %v247
      %843 = vmatmul.mubr.f32.gmra.mrb[0].mxu0 %v246
      %v844 = vpop.f32.mrb[0].mxu0
      %v845 = vadd.f32 %v499, %v844
      %v846 = vpop.f32.mrb[0].mxu0
      %v847 = vadd.f32 %v499, %v846
      %848 = vmatprep.mubr.f32.mxu0 %v250
      %849 = vmatmul.mubr.f32.gmra.mrb[0].mxu0 %v249
      %v850 = vpop.f32.mrb[0].mxu0
      %v851 = vadd.f32 %v504, %v850
      %v852 = vpop.f32.mrb[0].mxu0
      %v853 = vadd.f32 %v504, %v852
      %854 = vmatprep.mubr.f32.mxu0 %v253
      %855 = vmatmul.mubr.f32.gmra.mrb[0].mxu0 %v252
      %v856 = vpop.f32.mrb[0].mxu0
      %v857 = vadd.f32 %v509, %v856
      %v858 = vpop.f32.mrb[0].mxu0
      %v859 = vadd.f32 %v509, %v858
      %860 = vmatprep.mubr.f32.mxu0 %v256
      %861 = vmatmul.mubr.f32.gmra.mrb[0].mxu0 %v255
      %v862 = vpop.f32.mrb[0].mxu0
      %v863 = vadd.f32 %v514, %v862
      %v864 = vpop.f32.mrb[0].mxu0
      %v865 = vadd.f32 %v514, %v864
      %866 = vmatprep.mubr.f32.mxu0 %v259
      %867 = vmatmul.mubr.f32.gmra.mrb[0].mxu0 %v258
      %v868 = vpop.f32.mrb[0].mxu0
      %v869 = vadd.f32 %v519, %v868
      %v870 = vpop.f32.mrb[0].mxu0
      %v871 = vadd.f32 %v519, %v870
      %872 = vmatprep.mubr.f32.mxu0 %v262
      %873 = vmatmul.mubr.f32.gmra.mrb[0].mxu0 %v261
      %v874 = vpop.f32.mrb[0].mxu0
      %v875 = vadd.f32 %v524, %v874
      %v876 = vpop.f32.mrb[0].mxu0
      %v877 = vadd.f32 %v524, %v876
      %878 = vmatprep.mubr.f32.mxu0 %v265
      %879 = vmatmul.mubr.f32.gmra.mrb[0].mxu0 %v264
      %v880 = vpop.f32.mrb[0].mxu0
      %v881 = vadd.f32 %v529, %v880
      %v882 = vpop.f32.mrb[0].mxu0
      %v883 = vadd.f32 %v529, %v882
      %884 = vdwg.mxu0
      %885 = vmatprep.subr.mxu0 %v332
      %886 = vmatpush1.msra.mxu0 %v331
      %887 = vmatprep.subr.mxu0 %v334
      %888 = vmatpush1.msra.mxu0 %v333
      %889 = vmatprep.subr.mxu0 %v336
      %890 = vmatpush1.msra.mxu0 %v335
      %891 = vmatprep.subr.mxu0 %v338
      %892 = vmatpush1.msra.mxu0 %v337
      %893 = vmatprep.subr.mxu0 0.0
      %894 = vmatpush1.msra.mxu0 0.0
      %895 = vmatprep.subr.mxu0 0.0
      %896 = vmatpush1.msra.mxu0 0.0
      %897 = vmatprep.subr.mxu0 0.0
      %898 = vmatpush1.msra.mxu0 0.0
      %899 = vmatprep.subr.mxu0 0.0
      %900 = vmatpush1.msra.mxu0 0.0
      %901 = vmatprep.subr.mxu0 0.0
      %902 = vmatpush1.msra.mxu0 0.0
      %903 = vmatprep.subr.mxu0 0.0
      %904 = vmatpush1.msra.mxu0 0.0
      %905 = vmatprep.subr.mxu0 0.0
      %906 = vmatpush1.msra.mxu0 0.0
      %907 = vmatprep.subr.mxu0 0.0
      %908 = vmatpush1.msra.mxu0 0.0
      %909 = vmatprep.subr.mxu0 0.0
      %910 = vmatpush1.msra.mxu0 0.0
      %911 = vmatprep.subr.mxu0 0.0
      %912 = vmatpush1.msra.mxu0 0.0
      %913 = vmatprep.subr.mxu0 0.0
      %914 = vmatpush1.msra.mxu0 0.0
      %915 = vmatprep.subr.mxu0 0.0
      %916 = vmatpush1.msra.mxu0 0.0
      %917 = vmatprep.subr.mxu0 0.0
      %918 = vmatpush1.msra.mxu0 0.0
      %919 = vmatprep.subr.mxu0 0.0
      %920 = vmatpush1.msra.mxu0 0.0
      %921 = vmatprep.subr.mxu0 0.0
      %922 = vmatpush1.msra.mxu0 0.0
      %923 = vmatprep.subr.mxu0 0.0
      %924 = vmatpush1.msra.mxu0 0.0
      %925 = vmatprep.subr.mxu0 0.0
      %926 = vmatpush1.msra.mxu0 0.0
      %927 = vmatprep.subr.mxu0 0.0
      %928 = vmatpush1.msra.mxu0 0.0
      %929 = vmatprep.subr.mxu0 0.0
      %930 = vmatpush1.msra.mxu0 0.0
      %931 = vmatprep.subr.mxu0 0.0
      %932 = vmatpush1.msra.mxu0 0.0
      %933 = vmatprep.subr.mxu0 0.0
      %934 = vmatpush1.msra.mxu0 0.0
      %935 = vmatprep.subr.mxu0 0.0
      %936 = vmatpush1.msra.mxu0 0.0
      %937 = vmatprep.subr.mxu0 0.0
      %938 = vmatpush1.msra.mxu0 0.0
      %939 = vmatprep.subr.mxu0 0.0
      %940 = vmatpush1.msra.mxu0 0.0
      %941 = vmatprep.subr.mxu0 0.0
      %942 = vmatpush1.msra.mxu0 0.0
      %943 = vmatprep.subr.mxu0 0.0
      %944 = vmatpush1.msra.mxu0 0.0
      %945 = vmatprep.subr.mxu0 0.0
      %946 = vmatpush1.msra.mxu0 0.0
      %947 = vmatprep.subr.mxu0 0.0
      %948 = vmatpush1.msra.mxu0 0.0
      %949 = vmatprep.mubr.f32.mxu0 0.0
      %950 = vmatmul.mubr.f32.gmra.mrb[0].mxu0 %v533
      %v951 = vpop.f32.mrb[0].mxu0
      %v952 = vadd.f32 %v695, %v951
      %v953 = vpop.f32.mrb[0].mxu0
      %v954 = vadd.f32 %v697, %v953
      %955 = vmatprep.mubr.f32.mxu0 0.0
      %956 = vmatmul.mubr.f32.gmra.mrb[0].mxu0 %v536
      %v957 = vpop.f32.mrb[0].mxu0
      %v958 = vadd.f32 %v701, %v957
      %v959 = vpop.f32.mrb[0].mxu0
      %v960 = vadd.f32 %v703, %v959
      %961 = vmatprep.mubr.f32.mxu0 0.0
      %962 = vmatmul.mubr.f32.gmra.mrb[0].mxu0 %v539
      %v963 = vpop.f32.mrb[0].mxu0
      %v964 = vadd.f32 %v707, %v963
      %v965 = vpop.f32.mrb[0].mxu0
      %v966 = vadd.f32 %v709, %v965
      %967 = vmatprep.mubr.f32.mxu0 0.0
      %968 = vmatmul.mubr.f32.gmra.mrb[0].mxu0 %v542
      %v969 = vpop.f32.mrb[0].mxu0
      %v970 = vadd.f32 %v713, %v969
      %v971 = vpop.f32.mrb[0].mxu0
      %v972 = vadd.f32 %v715, %v971
      %973 = vmatprep.mubr.f32.mxu0 0.0
      %974 = vmatmul.mubr.f32.gmra.mrb[0].mxu0 %v545
      %v975 = vpop.f32.mrb[0].mxu0
      %v976 = vadd.f32 %v719, %v975
      %v977 = vpop.f32.mrb[0].mxu0
      %v978 = vadd.f32 %v721, %v977
      %979 = vmatprep.mubr.f32.mxu0 0.0
      %980 = vmatmul.mubr.f32.gmra.mrb[0].mxu0 %v548
      %v981 = vpop.f32.mrb[0].mxu0
      %v982 = vadd.f32 %v725, %v981
      %v983 = vpop.f32.mrb[0].mxu0
      %v984 = vadd.f32 %v727, %v983
      %985 = vmatprep.mubr.f32.mxu0 0.0
      %986 = vmatmul.mubr.f32.gmra.mrb[0].mxu0 %v551
      %v987 = vpop.f32.mrb[0].mxu0
      %v988 = vadd.f32 %v731, %v987
      %v989 = vpop.f32.mrb[0].mxu0
      %v990 = vadd.f32 %v733, %v989
      %991 = vmatprep.mubr.f32.mxu0 0.0
      %992 = vmatmul.mubr.f32.gmra.mrb[0].mxu0 %v554
      %v993 = vpop.f32.mrb[0].mxu0
      %v994 = vadd.f32 %v737, %v993
      %v995 = vpop.f32.mrb[0].mxu0
      %v996 = vadd.f32 %v739, %v995
      %997 = vmatprep.mubr.f32.mxu0 0.0
      %998 = vmatmul.mubr.f32.gmra.mrb[0].mxu0 %v557
      %v999 = vpop.f32.mrb[0].mxu0
      %v1000 = vadd.f32 %v743, %v999
      %v1001 = vpop.f32.mrb[0].mxu0
      %v1002 = vadd.f32 %v745, %v1001
      %1003 = vmatprep.mubr.f32.mxu0 0.0
      %1004 = vmatmul.mubr.f32.gmra.mrb[0].mxu0 %v560
      %v1005 = vpop.f32.mrb[0].mxu0
      %v1006 = vadd.f32 %v749, %v1005
      %v1007 = vpop.f32.mrb[0].mxu0
      %v1008 = vadd.f32 %v751, %v1007
      %1009 = vmatprep.mubr.f32.mxu0 0.0
      %1010 = vmatmul.mubr.f32.gmra.mrb[0].mxu0 %v563
      %v1011 = vpop.f32.mrb[0].mxu0
      %v1012 = vadd.f32 %v755, %v1011
      %v1013 = vpop.f32.mrb[0].mxu0
      %v1014 = vadd.f32 %v757, %v1013
      %1015 = vmatprep.mubr.f32.mxu0 0.0
      %1016 = vmatmul.mubr.f32.gmra.mrb[0].mxu0 %v566
      %v1017 = vpop.f32.mrb[0].mxu0
      %v1018 = vadd.f32 %v761, %v1017
      %v1019 = vpop.f32.mrb[0].mxu0
      %v1020 = vadd.f32 %v763, %v1019
      %1021 = vmatprep.mubr.f32.mxu0 0.0
      %1022 = vmatmul.mubr.f32.gmra.mrb[0].mxu0 %v569
      %v1023 = vpop.f32.mrb[0].mxu0
      %v1024 = vadd.f32 %v767, %v1023
      %v1025 = vpop.f32.mrb[0].mxu0
      %v1026 = vadd.f32 %v769, %v1025
      %1027 = vmatprep.mubr.f32.mxu0 0.0
      %1028 = vmatmul.mubr.f32.gmra.mrb[0].mxu0 %v572
      %v1029 = vpop.f32.mrb[0].mxu0
      %v1030 = vadd.f32 %v773, %v1029
      %v1031 = vpop.f32.mrb[0].mxu0
      %v1032 = vadd.f32 %v775, %v1031
      %1033 = vmatprep.mubr.f32.mxu0 0.0
      %1034 = vmatmul.mubr.f32.gmra.mrb[0].mxu0 %v575
      %v1035 = vpop.f32.mrb[0].mxu0
      %v1036 = vadd.f32 %v779, %v1035
      %v1037 = vpop.f32.mrb[0].mxu0
      %v1038 = vadd.f32 %v781, %v1037
      %1039 = vmatprep.mubr.f32.mxu0 0.0
      %1040 = vmatmul.mubr.f32.gmra.mrb[0].mxu0 %v578
      %v1041 = vpop.f32.mrb[0].mxu0
      %v1042 = vadd.f32 %v785, %v1041
      %v1043 = vpop.f32.mrb[0].mxu0
      %v1044 = vadd.f32 %v787, %v1043
      %1045 = vmatprep.mubr.f32.mxu0 0.0
      %1046 = vmatmul.mubr.f32.gmra.mrb[0].mxu0 %v581
      %v1047 = vpop.f32.mrb[0].mxu0
      %v1048 = vadd.f32 %v791, %v1047
      %v1049 = vpop.f32.mrb[0].mxu0
      %v1050 = vadd.f32 %v793, %v1049
      %1051 = vmatprep.mubr.f32.mxu0 0.0
      %1052 = vmatmul.mubr.f32.gmra.mrb[0].mxu0 %v584
      %v1053 = vpop.f32.mrb[0].mxu0
      %v1054 = vadd.f32 %v797, %v1053
      %v1055 = vpop.f32.mrb[0].mxu0
      %v1056 = vadd.f32 %v799, %v1055
      %1057 = vmatprep.mubr.f32.mxu0 0.0
      %1058 = vmatmul.mubr.f32.gmra.mrb[0].mxu0 %v587
      %v1059 = vpop.f32.mrb[0].mxu0
      %v1060 = vadd.f32 %v803, %v1059
      %v1061 = vpop.f32.mrb[0].mxu0
      %v1062 = vadd.f32 %v805, %v1061
      %1063 = vmatprep.mubr.f32.mxu0 0.0
      %1064 = vmatmul.mubr.f32.gmra.mrb[0].mxu0 %v590
      %v1065 = vpop.f32.mrb[0].mxu0
      %v1066 = vadd.f32 %v809, %v1065
      %v1067 = vpop.f32.mrb[0].mxu0
      %v1068 = vadd.f32 %v811, %v1067
      %1069 = vmatprep.mubr.f32.mxu0 0.0
      %1070 = vmatmul.mubr.f32.gmra.mrb[0].mxu0 %v593
      %v1071 = vpop.f32.mrb[0].mxu0
      %v1072 = vadd.f32 %v815, %v1071
      %v1073 = vpop.f32.mrb[0].mxu0
      %v1074 = vadd.f32 %v817, %v1073
      %1075 = vmatprep.mubr.f32.mxu0 0.0
      %1076 = vmatmul.mubr.f32.gmra.mrb[0].mxu0 %v596
      %v1077 = vpop.f32.mrb[0].mxu0
      %v1078 = vadd.f32 %v821, %v1077
      %v1079 = vpop.f32.mrb[0].mxu0
      %v1080 = vadd.f32 %v823, %v1079
      %1081 = vmatprep.mubr.f32.mxu0 0.0
      %1082 = vmatmul.mubr.f32.gmra.mrb[0].mxu0 %v599
      %v1083 = vpop.f32.mrb[0].mxu0
      %v1084 = vadd.f32 %v827, %v1083
      %v1085 = vpop.f32.mrb[0].mxu0
      %v1086 = vadd.f32 %v829, %v1085
      %1087 = vmatprep.mubr.f32.mxu0 0.0
      %1088 = vmatmul.mubr.f32.gmra.mrb[0].mxu0 %v602
      %v1089 = vpop.f32.mrb[0].mxu0
      %v1090 = vadd.f32 %v833, %v1089
      %v1091 = vpop.f32.mrb[0].mxu0
      %v1092 = vadd.f32 %v835, %v1091
      %1093 = vmatprep.mubr.f32.mxu0 0.0
      %1094 = vmatmul.mubr.f32.gmra.mrb[0].mxu0 %v605
      %v1095 = vpop.f32.mrb[0].mxu0
      %v1096 = vadd.f32 %v839, %v1095
      %v1097 = vpop.f32.mrb[0].mxu0
      %v1098 = vadd.f32 %v841, %v1097
      %1099 = vmatprep.mubr.f32.mxu0 0.0
      %1100 = vmatmul.mubr.f32.gmra.mrb[0].mxu0 %v608
      %v1101 = vpop.f32.mrb[0].mxu0
      %v1102 = vadd.f32 %v845, %v1101
      %v1103 = vpop.f32.mrb[0].mxu0
      %v1104 = vadd.f32 %v847, %v1103
      %1105 = vmatprep.mubr.f32.mxu0 0.0
      %1106 = vmatmul.mubr.f32.gmra.mrb[0].mxu0 %v611
      %v1107 = vpop.f32.mrb[0].mxu0
      %v1108 = vadd.f32 %v851, %v1107
      %v1109 = vpop.f32.mrb[0].mxu0
      %v1110 = vadd.f32 %v853, %v1109
      %1111 = vmatprep.mubr.f32.mxu0 0.0
      %1112 = vmatmul.mubr.f32.gmra.mrb[0].mxu0 %v614
      %v1113 = vpop.f32.mrb[0].mxu0
      %v1114 = vadd.f32 %v857, %v1113
      %v1115 = vpop.f32.mrb[0].mxu0
      %v1116 = vadd.f32 %v859, %v1115
      %1117 = vmatprep.mubr.f32.mxu0 0.0
      %1118 = vmatmul.mubr.f32.gmra.mrb[0].mxu0 %v617
      %v1119 = vpop.f32.mrb[0].mxu0
      %v1120 = vadd.f32 %v863, %v1119
      %v1121 = vpop.f32.mrb[0].mxu0
      %v1122 = vadd.f32 %v865, %v1121
      %1123 = vmatprep.mubr.f32.mxu0 0.0
      %1124 = vmatmul.mubr.f32.gmra.mrb[0].mxu0 %v620
      %v1125 = vpop.f32.mrb[0].mxu0
      %v1126 = vadd.f32 %v869, %v1125
      %v1127 = vpop.f32.mrb[0].mxu0
      %v1128 = vadd.f32 %v871, %v1127
      %1129 = vmatprep.mubr.f32.mxu0 0.0
      %1130 = vmatmul.mubr.f32.gmra.mrb[0].mxu0 %v623
      %v1131 = vpop.f32.mrb[0].mxu0
      %v1132 = vadd.f32 %v875, %v1131
      %v1133 = vpop.f32.mrb[0].mxu0
      %v1134 = vadd.f32 %v877, %v1133
      %1135 = vmatprep.mubr.f32.mxu0 0.0
      %1136 = vmatmul.mubr.f32.gmra.mrb[0].mxu0 %v626
      %v1137 = vpop.f32.mrb[0].mxu0
      %v1138 = vadd.f32 %v881, %v1137
      %v1139 = vpop.f32.mrb[0].mxu0
      %v1140 = vadd.f32 %v883, %v1139
      %1141 = vdwg.mxu0
      %v1142 = vmax.f32 %v952, 0.0
      %v1143 = vmax.f32 %v954, 0.0
      %v1144 = vmax.f32 %v958, 0.0
      %v1145 = vmax.f32 %v960, 0.0
      %v1146 = vmax.f32 %v964, 0.0
      %v1147 = vmax.f32 %v966, 0.0
      %v1148 = vmax.f32 %v970, 0.0
      %v1149 = vmax.f32 %v972, 0.0
      %v1150 = vmax.f32 %v976, 0.0
      %v1151 = vmax.f32 %v978, 0.0
      %v1152 = vmax.f32 %v982, 0.0
      %v1153 = vmax.f32 %v984, 0.0
      %v1154 = vmax.f32 %v988, 0.0
      %v1155 = vmax.f32 %v990, 0.0
      %v1156 = vmax.f32 %v994, 0.0
      %v1157 = vmax.f32 %v996, 0.0
      %v1158 = vmax.f32 %v1000, 0.0
      %v1159 = vmax.f32 %v1002, 0.0
      %v1160 = vmax.f32 %v1006, 0.0
      %v1161 = vmax.f32 %v1008, 0.0
      %v1162 = vmax.f32 %v1012, 0.0
      %v1163 = vmax.f32 %v1014, 0.0
      %v1164 = vmax.f32 %v1018, 0.0
      %v1165 = vmax.f32 %v1020, 0.0
      %v1166 = vmax.f32 %v1024, 0.0
      %v1167 = vmax.f32 %v1026, 0.0
      %v1168 = vmax.f32 %v1030, 0.0
      %v1169 = vmax.f32 %v1032, 0.0
      %v1170 = vmax.f32 %v1036, 0.0
      %v1171 = vmax.f32 %v1038, 0.0
      %v1172 = vmax.f32 %v1042, 0.0
      %v1173 = vmax.f32 %v1044, 0.0
      %v1174 = vmax.f32 %v1048, 0.0
      %v1175 = vmax.f32 %v1050, 0.0
      %v1176 = vmax.f32 %v1054, 0.0
      %v1177 = vmax.f32 %v1056, 0.0
      %v1178 = vmax.f32 %v1060, 0.0
      %v1179 = vmax.f32 %v1062, 0.0
      %v1180 = vmax.f32 %v1066, 0.0
      %v1181 = vmax.f32 %v1068, 0.0
      %v1182 = vmax.f32 %v1072, 0.0
      %v1183 = vmax.f32 %v1074, 0.0
      %v1184 = vmax.f32 %v1078, 0.0
      %v1185 = vmax.f32 %v1080, 0.0
      %v1186 = vmax.f32 %v1084, 0.0
      %v1187 = vmax.f32 %v1086, 0.0
      %v1188 = vmax.f32 %v1090, 0.0
      %v1189 = vmax.f32 %v1092, 0.0
      %v1190 = vmax.f32 %v1096, 0.0
      %v1191 = vmax.f32 %v1098, 0.0
      %v1192 = vmax.f32 %v1102, 0.0
      %v1193 = vmax.f32 %v1104, 0.0
      %v1194 = vmax.f32 %v1108, 0.0
      %v1195 = vmax.f32 %v1110, 0.0
      %v1196 = vmax.f32 %v1114, 0.0
      %v1197 = vmax.f32 %v1116, 0.0
      %v1198 = vmax.f32 %v1120, 0.0
      %v1199 = vmax.f32 %v1122, 0.0
      %v1200 = vmax.f32 %v1126, 0.0
      %v1201 = vmax.f32 %v1128, 0.0
      %v1202 = vmax.f32 %v1132, 0.0
      %v1203 = vmax.f32 %v1134, 0.0
      %v1204 = vmax.f32 %v1138, 0.0
      %v1205 = vmax.f32 %v1140, 0.0
      %1206 = vst [vmem:[%s170] sm:$0xff] %v1142
      %1207 = vst [vmem:[%s170 + $0x8] sm:$0xff] %v1143
      %1208 = vst [vmem:[%s170 + $0x10] sm:$0xff] %v1144
      %1209 = vst [vmem:[%s170 + $0x18] sm:$0xff] %v1145
      %1210 = vst [vmem:[%s170 + $0x20] sm:$0xff] %v1146
      %1211 = vst [vmem:[%s170 + $0x28] sm:$0xff] %v1147
      %1212 = vst [vmem:[%s170 + $0x30] sm:$0xff] %v1148
      %1213 = vst [vmem:[%s170 + $0x38] sm:$0xff] %v1149
      %1214 = vst [vmem:[%s170 + $0x40] sm:$0xff] %v1150
      %1215 = vst [vmem:[%s170 + $0x48] sm:$0xff] %v1151
      %1216 = vst [vmem:[%s170 + $0x50] sm:$0xff] %v1152
      %1217 = vst [vmem:[%s170 + $0x58] sm:$0xff] %v1153
      %1218 = vst [vmem:[%s170 + $0x60] sm:$0xff] %v1154
      %1219 = vst [vmem:[%s170 + $0x68] sm:$0xff] %v1155
      %1220 = vst [vmem:[%s170 + $0x70] sm:$0xff] %v1156
      %1221 = vst [vmem:[%s170 + $0x78] sm:$0xff] %v1157
      %1222 = vst [vmem:[%s170 + $0x80] sm:$0xff] %v1158
      %1223 = vst [vmem:[%s170 + $0x88] sm:$0xff] %v1159
      %1224 = vst [vmem:[%s170 + $0x90] sm:$0xff] %v1160
      %1225 = vst [vmem:[%s170 + $0x98] sm:$0xff] %v1161
      %1226 = vst [vmem:[%s170 + $0xa0] sm:$0xff] %v1162
      %1227 = vst [vmem:[%s170 + $0xa8] sm:$0xff] %v1163
      %1228 = vst [vmem:[%s170 + $0xb0] sm:$0xff] %v1164
      %1229 = vst [vmem:[%s170 + $0xb8] sm:$0xff] %v1165
      %1230 = vst [vmem:[%s170 + $0xc0] sm:$0xff] %v1166
      %1231 = vst [vmem:[%s170 + $0xc8] sm:$0xff] %v1167
      %1232 = vst [vmem:[%s170 + $0xd0] sm:$0xff] %v1168
      %1233 = vst [vmem:[%s170 + $0xd8] sm:$0xff] %v1169
      %1234 = vst [vmem:[%s170 + $0xe0] sm:$0xff] %v1170
      %1235 = vst [vmem:[%s170 + $0xe8] sm:$0xff] %v1171
      %1236 = vst [vmem:[%s170 + $0xf0] sm:$0xff] %v1172
      %1237 = vst [vmem:[%s170 + $0xf8] sm:$0xff] %v1173
      %1238 = vst [vmem:[%s170 + $0x100] sm:$0xff] %v1174
      %1239 = vst [vmem:[%s170 + $0x108] sm:$0xff] %v1175
      %1240 = vst [vmem:[%s170 + $0x110] sm:$0xff] %v1176
      %1241 = vst [vmem:[%s170 + $0x118] sm:$0xff] %v1177
      %1242 = vst [vmem:[%s170 + $0x120] sm:$0xff] %v1178
      %1243 = vst [vmem:[%s170 + $0x128] sm:$0xff] %v1179
      %1244 = vst [vmem:[%s170 + $0x130] sm:$0xff] %v1180
      %1245 = vst [vmem:[%s170 + $0x138] sm:$0xff] %v1181
      %1246 = vst [vmem:[%s170 + $0x140] sm:$0xff] %v1182
      %1247 = vst [vmem:[%s170 + $0x148] sm:$0xff] %v1183
      %1248 = vst [vmem:[%s170 + $0x150] sm:$0xff] %v1184
      %1249 = vst [vmem:[%s170 + $0x158] sm:$0xff] %v1185
      %1250 = vst [vmem:[%s170 + $0x160] sm:$0xff] %v1186
      %1251 = vst [vmem:[%s170 + $0x168] sm:$0xff] %v1187
      %1252 = vst [vmem:[%s170 + $0x170] sm:$0xff] %v1188
      %1253 = vst [vmem:[%s170 + $0x178] sm:$0xff] %v1189
      %1254 = vst [vmem:[%s170 + $0x180] sm:$0xff] %v1190
      %1255 = vst [vmem:[%s170 + $0x188] sm:$0xff] %v1191
      %1256 = vst [vmem:[%s170 + $0x190] sm:$0xff] %v1192
      %1257 = vst [vmem:[%s170 + $0x198] sm:$0xff] %v1193
      %1258 = vst [vmem:[%s170 + $0x1a0] sm:$0xff] %v1194
      %1259 = vst [vmem:[%s170 + $0x1a8] sm:$0xff] %v1195
      %1260 = vst [vmem:[%s170 + $0x1b0] sm:$0xff] %v1196
      %1261 = vst [vmem:[%s170 + $0x1b8] sm:$0xff] %v1197
      %1262 = vst [vmem:[%s170 + $0x1c0] sm:$0xff] %v1198
      %1263 = vst [vmem:[%s170 + $0x1c8] sm:$0xff] %v1199
      %1264 = vst [vmem:[%s170 + $0x1d0] sm:$0xff] %v1200
      %1265 = vst [vmem:[%s170 + $0x1d8] sm:$0xff] %v1201
      %1266 = vst [vmem:[%s170 + $0x1e0] sm:$0xff] %v1202
      %1267 = vst [vmem:[%s170 + $0x1e8] sm:$0xff] %v1203
      %1268 = vst [vmem:[%s170 + $0x1f0] sm:$0xff] %v1204
      %1269 = vst [vmem:[%s170 + $0x1f8] sm:$0xff] %v1205
      %p1270 = scmp.lt.s32.totalorder %s14, 5
      %s1271 = scalar_select %p1270, %s14, 5
      %s1272 = smul.addr %s1271, 64
      %s1273 = smul.addr %s1272, 8
      %s1274 = scalar_lea.vmem %s3, %s1273
      // Predicated region
      $region33: #{up_block_forward.2} parent=31 // pred_check
        %p1275 = pneg %p100
      $region34: #{up_block_forward.2} parent=31 // pred_check_branch
        %1277 = sbr.rel (%p1275) target = $region36
      $region35: #{up_block_forward.2} parent=31 // pred_region
        _
      $region36: #{up_block_forward.2} parent=31 // pred_fallthru
        _
    $region32: #{up_block_forward.2} parent=5 // pred_fallthru
      _
    %p1278 = scmp.le.s32.totalorder 2, %s9
    // Predicated region
    $region37: #{up_block_forward.2} parent=5 // pred_check
      %p1279 = pneg %p1278
    $region38: #{up_block_forward.2} parent=5 // pred_check_branch
      %1281 = sbr.rel (%p1279) target = $region40
    $region39: #{up_block_forward.2} parent=5 // pred_region
      %s1282 = ssub.s32 %s9, 2
      // Predicated region
      $region41: #{up_block_forward.2} parent=39 // pred_check
        %p1283 = pneg %p106
      $region42: #{up_block_forward.2} parent=39 // pred_check_branch
        %1285 = sbr.rel (%p1283) target = $region44
      $region43: #{up_block_forward.2} parent=39 // pred_region
        %p1286 = scmp.lt.s32.totalorder %s15, 5
        %s1287 = scalar_select %p1286, %s15, 5
        %s1288 = smul.addr %s1287, 64
        %s1289 = smul.addr %s1288, 8
        %s1290 = scalar_lea.vmem %s3, %s1289
      $region44: #{up_block_forward.2} parent=39 // pred_fallthru
        _
    $region40: #{up_block_forward.2} parent=5 // pred_fallthru
      _
  $region6: #{up_block_forward.2} parent=0 // loop_footer
    %s13 = sadd.s32 1, %s9
  $region7: #{up_block_forward.2} parent=0 // loop_footer_branch
    %8 = sbr.rel target = $region3
  $region8: #{up_block_forward.2} parent=0 // loop_exit
    _

// kernel: up_block_forward.3
$region0: #{up_block_forward.3}
  #allocation0 [shape = 'u32[]', space=smem, size = 0x4, offset = 0x4, fixed_abs, tag = 'smem constant byte address 0x4 - core index']
  #allocation1 [shape = 'u32[144,128]{1,0:T(1,128)}', space=vmem, size = 0x12000, scoped, tag = 'internal scratch']
  %s0 = inlined_call_operand.vmem [shape: f32[6,64,1024], index: 0, kind: input, shape index: {}]
  %s1 = inlined_call_operand.vmem [shape: f32[6,64,1024], index: 1, kind: output, shape index: {}]
  %s2 = sld [smem:[#allocation0]]
  $region14: #{up_block_forward.3} parent=0
    _
  %s4 = ssub.s32 1, %s2
  %s5 = scalar_select 0, %s4, %s2
  // Predicated region
  $region2: #{up_block_forward.3} parent=0 // pred_check
    _
  $region3: #{up_block_forward.3} parent=0 // pred_check_branch
    %7 = sbr.rel (0) target = $region5
  $region4: #{up_block_forward.3} parent=0 // pred_region
    _
  $region5: #{up_block_forward.3} parent=0 // pred_fallthru
    _
  %v8 = vld [vmem:[%s0 + $0x100] sm:$0xff]
  %v9 = vld [vmem:[%s0 + $0x108] sm:$0xff]
  %v10 = vld [vmem:[%s0 + $0x110] sm:$0xff]
  %v11 = vld [vmem:[%s0 + $0x118] sm:$0xff]
  %v12 = vld [vmem:[%s0 + $0x120] sm:$0xff]
  %v13 = vld [vmem:[%s0 + $0x128] sm:$0xff]
  %v14 = vld [vmem:[%s0 + $0x130] sm:$0xff]
  %v15 = vld [vmem:[%s0 + $0x138] sm:$0xff]
  %v16 = vld [vmem:[%s0 + $0x140] sm:$0xff]
  %v17 = vld [vmem:[%s0 + $0x148] sm:$0xff]
  %v18 = vld [vmem:[%s0 + $0x150] sm:$0xff]
  %v19 = vld [vmem:[%s0 + $0x158] sm:$0xff]
  %v20 = vld [vmem:[%s0 + $0x160] sm:$0xff]
  %v21 = vld [vmem:[%s0 + $0x168] sm:$0xff]
  %v22 = vld [vmem:[%s0 + $0x170] sm:$0xff]
  %v23 = vld [vmem:[%s0 + $0x178] sm:$0xff]
  %v24 = vld [vmem:[%s0 + $0x180] sm:$0xff]
  %v25 = vld [vmem:[%s0 + $0x188] sm:$0xff]
  %v26 = vld [vmem:[%s0 + $0x190] sm:$0xff]
  %v27 = vld [vmem:[%s0 + $0x198] sm:$0xff]
  %v28 = vld [vmem:[%s0 + $0x1a0] sm:$0xff]
  %v29 = vld [vmem:[%s0 + $0x1a8] sm:$0xff]
  %v30 = vld [vmem:[%s0 + $0x1b0] sm:$0xff]
  %v31 = vld [vmem:[%s0 + $0x1b8] sm:$0xff]
  %v32 = vld [vmem:[%s0 + $0x1c0] sm:$0xff]
  %v33 = vld [vmem:[%s0 + $0x1c8] sm:$0xff]
  %v34 = vld [vmem:[%s0 + $0x1d0] sm:$0xff]
  %v35 = vld [vmem:[%s0 + $0x1d8] sm:$0xff]
  %v36 = vld [vmem:[%s0 + $0x1e0] sm:$0xff]
  %v37 = vld [vmem:[%s0 + $0x1e8] sm:$0xff]
  %v38 = vld [vmem:[%s0 + $0x1f0] sm:$0xff]
  %v39 = vld [vmem:[%s0 + $0x1f8] sm:$0xff]
  %v40 = vld [vmem:[%s0 + $0x300] sm:$0xff]
  %v41 = vld [vmem:[%s0 + $0x308] sm:$0xff]
  %v42 = vld [vmem:[%s0 + $0x310] sm:$0xff]
  %v43 = vld [vmem:[%s0 + $0x318] sm:$0xff]
  %v44 = vld [vmem:[%s0 + $0x320] sm:$0xff]
  %v45 = vld [vmem:[%s0 + $0x328] sm:$0xff]
  %v46 = vld [vmem:[%s0 + $0x330] sm:$0xff]
  %v47 = vld [vmem:[%s0 + $0x338] sm:$0xff]
  %v48 = vld [vmem:[%s0 + $0x340] sm:$0xff]
  %v49 = vld [vmem:[%s0 + $0x348] sm:$0xff]
  %v50 = vld [vmem:[%s0 + $0x350] sm:$0xff]
  %v51 = vld [vmem:[%s0 + $0x358] sm:$0xff]
  %v52 = vld [vmem:[%s0 + $0x360] sm:$0xff]
  %v53 = vld [vmem:[%s0 + $0x368] sm:$0xff]
  %v54 = vld [vmem:[%s0 + $0x370] sm:$0xff]
  %v55 = vld [vmem:[%s0 + $0x378] sm:$0xff]
  %v56 = vld [vmem:[%s0 + $0x380] sm:$0xff]
  %v57 = vld [vmem:[%s0 + $0x388] sm:$0xff]
  %v58 = vld [vmem:[%s0 + $0x390] sm:$0xff]
  %v59 = vld [vmem:[%s0 + $0x398] sm:$0xff]
  %v60 = vld [vmem:[%s0 + $0x3a0] sm:$0xff]
  %v61 = vld [vmem:[%s0 + $0x3a8] sm:$0xff]
  %v62 = vld [vmem:[%s0 + $0x3b0] sm:$0xff]
  %v63 = vld [vmem:[%s0 + $0x3b8] sm:$0xff]
  %v64 = vld [vmem:[%s0 + $0x3c0] sm:$0xff]
  %v65 = vld [vmem:[%s0 + $0x3c8] sm:$0xff]
  %v66 = vld [vmem:[%s0 + $0x3d0] sm:$0xff]
  %v67 = vld [vmem:[%s0 + $0x3d8] sm:$0xff]
  %v68 = vld [vmem:[%s0 + $0x3e0] sm:$0xff]
  %v69 = vld [vmem:[%s0 + $0x3e8] sm:$0xff]
  %v70 = vld [vmem:[%s0 + $0x3f0] sm:$0xff]
  %v71 = vld [vmem:[%s0 + $0x3f8] sm:$0xff]
  %v72 = vld [vmem:[%s0 + $0x500] sm:$0xff]
  %v73 = vld [vmem:[%s0 + $0x508] sm:$0xff]
  %v74 = vld [vmem:[%s0 + $0x510] sm:$0xff]
  %v75 = vld [vmem:[%s0 + $0x518] sm:$0xff]
  %v76 = vld [vmem:[%s0 + $0x520] sm:$0xff]
  %v77 = vld [vmem:[%s0 + $0x528] sm:$0xff]
  %v78 = vld [vmem:[%s0 + $0x530] sm:$0xff]
  %v79 = vld [vmem:[%s0 + $0x538] sm:$0xff]
  %v80 = vld [vmem:[%s0 + $0x540] sm:$0xff]
  %v81 = vld [vmem:[%s0 + $0x548] sm:$0xff]
  %v82 = vld [vmem:[%s0 + $0x550] sm:$0xff]
  %v83 = vld [vmem:[%s0 + $0x558] sm:$0xff]
  %v84 = vld [vmem:[%s0 + $0x560] sm:$0xff]
  %v85 = vld [vmem:[%s0 + $0x568] sm:$0xff]
  %v86 = vld [vmem:[%s0 + $0x570] sm:$0xff]
  %v87 = vld [vmem:[%s0 + $0x578] sm:$0xff]
  %v88 = vld [vmem:[%s0 + $0x580] sm:$0xff]
  %v89 = vld [vmem:[%s0 + $0x588] sm:$0xff]
  %v90 = vld [vmem:[%s0 + $0x590] sm:$0xff]
  %v91 = vld [vmem:[%s0 + $0x598] sm:$0xff]
  %v92 = vld [vmem:[%s0 + $0x5a0] sm:$0xff]
  %v93 = vld [vmem:[%s0 + $0x5a8] sm:$0xff]
  %v94 = vld [vmem:[%s0 + $0x5b0] sm:$0xff]
  %v95 = vld [vmem:[%s0 + $0x5b8] sm:$0xff]
  %v96 = vld [vmem:[%s0 + $0x5c0] sm:$0xff]
  %v97 = vld [vmem:[%s0 + $0x5c8] sm:$0xff]
  %v98 = vld [vmem:[%s0 + $0x5d0] sm:$0xff]
  %v99 = vld [vmem:[%s0 + $0x5d8] sm:$0xff]
  %v100 = vld [vmem:[%s0 + $0x5e0] sm:$0xff]
  %v101 = vld [vmem:[%s0 + $0x5e8] sm:$0xff]
  %v102 = vld [vmem:[%s0 + $0x5f0] sm:$0xff]
  %v103 = vld [vmem:[%s0 + $0x5f8] sm:$0xff]
  %v104 = vld [vmem:[%s0 + $0x700] sm:$0xff]
  %v105 = vld [vmem:[%s0 + $0x708] sm:$0xff]
  %v106 = vld [vmem:[%s0 + $0x710] sm:$0xff]
  %v107 = vld [vmem:[%s0 + $0x718] sm:$0xff]
  %v108 = vld [vmem:[%s0 + $0x720] sm:$0xff]
  %v109 = vld [vmem:[%s0 + $0x728] sm:$0xff]
  %v110 = vld [vmem:[%s0 + $0x730] sm:$0xff]
  %v111 = vld [vmem:[%s0 + $0x738] sm:$0xff]
  %v112 = vld [vmem:[%s0 + $0x740] sm:$0xff]
  %v113 = vld [vmem:[%s0 + $0x748] sm:$0xff]
  %v114 = vld [vmem:[%s0 + $0x750] sm:$0xff]
  %v115 = vld [vmem:[%s0 + $0x758] sm:$0xff]
  %v116 = vld [vmem:[%s0 + $0x760] sm:$0xff]
  %v117 = vld [vmem:[%s0 + $0x768] sm:$0xff]
  %v118 = vld [vmem:[%s0 + $0x770] sm:$0xff]
  %v119 = vld [vmem:[%s0 + $0x778] sm:$0xff]
  %v120 = vld [vmem:[%s0 + $0x780] sm:$0xff]
  %v121 = vld [vmem:[%s0 + $0x788] sm:$0xff]
  %v122 = vld [vmem:[%s0 + $0x790] sm:$0xff]
  %v123 = vld [vmem:[%s0 + $0x798] sm:$0xff]
  %v124 = vld [vmem:[%s0 + $0x7a0] sm:$0xff]
  %v125 = vld [vmem:[%s0 + $0x7a8] sm:$0xff]
  %v126 = vld [vmem:[%s0 + $0x7b0] sm:$0xff]
  %v127 = vld [vmem:[%s0 + $0x7b8] sm:$0xff]
  %v128 = vld [vmem:[%s0 + $0x7c0] sm:$0xff]
  %v129 = vld [vmem:[%s0 + $0x7c8] sm:$0xff]
  %v130 = vld [vmem:[%s0 + $0x7d0] sm:$0xff]
  %v131 = vld [vmem:[%s0 + $0x7d8] sm:$0xff]
  %v132 = vld [vmem:[%s0 + $0x7e0] sm:$0xff]
  %v133 = vld [vmem:[%s0 + $0x7e8] sm:$0xff]
  %v134 = vld [vmem:[%s0 + $0x7f0] sm:$0xff]
  %v135 = vld [vmem:[%s0 + $0x7f8] sm:$0xff]
  %v136 = vld [vmem:[%s0 + $0x900] sm:$0xff]
  %v137 = vld [vmem:[%s0 + $0x908] sm:$0xff]
  %v138 = vld [vmem:[%s0 + $0x910] sm:$0xff]
  %v139 = vld [vmem:[%s0 + $0x918] sm:$0xff]
  %v140 = vld [vmem:[%s0 + $0x920] sm:$0xff]
  %v141 = vld [vmem:[%s0 + $0x928] sm:$0xff]
  %v142 = vld [vmem:[%s0 + $0x930] sm:$0xff]
  %v143 = vld [vmem:[%s0 + $0x938] sm:$0xff]
  %v144 = vld [vmem:[%s0 + $0x940] sm:$0xff]
  %v145 = vld [vmem:[%s0 + $0x948] sm:$0xff]
  %v146 = vld [vmem:[%s0 + $0x950] sm:$0xff]
  %v147 = vld [vmem:[%s0 + $0x958] sm:$0xff]
  %v148 = vld [vmem:[%s0 + $0x960] sm:$0xff]
  %v149 = vld [vmem:[%s0 + $0x968] sm:$0xff]
  %v150 = vld [vmem:[%s0 + $0x970] sm:$0xff]
  %v151 = vld [vmem:[%s0 + $0x978] sm:$0xff]
  %v152 = vld [vmem:[%s0 + $0x980] sm:$0xff]
  %v153 = vld [vmem:[%s0 + $0x988] sm:$0xff]
  %v154 = vld [vmem:[%s0 + $0x990] sm:$0xff]
  %v155 = vld [vmem:[%s0 + $0x998] sm:$0xff]
  %v156 = vld [vmem:[%s0 + $0x9a0] sm:$0xff]
  %v157 = vld [vmem:[%s0 + $0x9a8] sm:$0xff]
  %v158 = vld [vmem:[%s0 + $0x9b0] sm:$0xff]
  %v159 = vld [vmem:[%s0 + $0x9b8] sm:$0xff]
  %v160 = vld [vmem:[%s0 + $0x9c0] sm:$0xff]
  %v161 = vld [vmem:[%s0 + $0x9c8] sm:$0xff]
  %v162 = vld [vmem:[%s0 + $0x9d0] sm:$0xff]
  %v163 = vld [vmem:[%s0 + $0x9d8] sm:$0xff]
  %v164 = vld [vmem:[%s0 + $0x9e0] sm:$0xff]
  %v165 = vld [vmem:[%s0 + $0x9e8] sm:$0xff]
  %v166 = vld [vmem:[%s0 + $0x9f0] sm:$0xff]
  %v167 = vld [vmem:[%s0 + $0x9f8] sm:$0xff]
  %v168 = vld [vmem:[%s0 + $0xb00] sm:$0xff]
  %v169 = vld [vmem:[%s0 + $0xb08] sm:$0xff]
  %v170 = vld [vmem:[%s0 + $0xb10] sm:$0xff]
  %v171 = vld [vmem:[%s0 + $0xb18] sm:$0xff]
  %v172 = vld [vmem:[%s0 + $0xb20] sm:$0xff]
  %v173 = vld [vmem:[%s0 + $0xb28] sm:$0xff]
  %v174 = vld [vmem:[%s0 + $0xb30] sm:$0xff]
  %v175 = vld [vmem:[%s0 + $0xb38] sm:$0xff]
  %v176 = vld [vmem:[%s0 + $0xb40] sm:$0xff]
  %v177 = vld [vmem:[%s0 + $0xb48] sm:$0xff]
  %v178 = vld [vmem:[%s0 + $0xb50] sm:$0xff]
  %v179 = vld [vmem:[%s0 + $0xb58] sm:$0xff]
  %v180 = vld [vmem:[%s0 + $0xb60] sm:$0xff]
  %v181 = vld [vmem:[%s0 + $0xb68] sm:$0xff]
  %v182 = vld [vmem:[%s0 + $0xb70] sm:$0xff]
  %v183 = vld [vmem:[%s0 + $0xb78] sm:$0xff]
  %v184 = vld [vmem:[%s0 + $0xb80] sm:$0xff]
  %v185 = vld [vmem:[%s0 + $0xb88] sm:$0xff]
  %v186 = vld [vmem:[%s0 + $0xb90] sm:$0xff]
  %v187 = vld [vmem:[%s0 + $0xb98] sm:$0xff]
  %v188 = vld [vmem:[%s0 + $0xba0] sm:$0xff]
  %v189 = vld [vmem:[%s0 + $0xba8] sm:$0xff]
  %v190 = vld [vmem:[%s0 + $0xbb0] sm:$0xff]
  %v191 = vld [vmem:[%s0 + $0xbb8] sm:$0xff]
  %v192 = vld [vmem:[%s0 + $0xbc0] sm:$0xff]
  %v193 = vld [vmem:[%s0 + $0xbc8] sm:$0xff]
  %v194 = vld [vmem:[%s0 + $0xbd0] sm:$0xff]
  %v195 = vld [vmem:[%s0 + $0xbd8] sm:$0xff]
  %v196 = vld [vmem:[%s0 + $0xbe0] sm:$0xff]
  %v197 = vld [vmem:[%s0 + $0xbe8] sm:$0xff]
  %v198 = vld [vmem:[%s0 + $0xbf0] sm:$0xff]
  %v199 = vld [vmem:[%s0 + $0xbf8] sm:$0xff]
  %200 = vst [vmem:[%s1 + $0x100] sm:$0xff] %v8
  %201 = vst [vmem:[%s1 + $0x108] sm:$0xff] %v9
  %202 = vst [vmem:[%s1 + $0x110] sm:$0xff] %v10
  %203 = vst [vmem:[%s1 + $0x118] sm:$0xff] %v11
  %204 = vst [vmem:[%s1 + $0x120] sm:$0xff] %v12
  %205 = vst [vmem:[%s1 + $0x128] sm:$0xff] %v13
  %206 = vst [vmem:[%s1 + $0x130] sm:$0xff] %v14
  %207 = vst [vmem:[%s1 + $0x138] sm:$0xff] %v15
  %208 = vst [vmem:[%s1 + $0x140] sm:$0xff] %v16
  %209 = vst [vmem:[%s1 + $0x148] sm:$0xff] %v17
  %210 = vst [vmem:[%s1 + $0x150] sm:$0xff] %v18
  %211 = vst [vmem:[%s1 + $0x158] sm:$0xff] %v19
  %212 = vst [vmem:[%s1 + $0x160] sm:$0xff] %v20
  %213 = vst [vmem:[%s1 + $0x168] sm:$0xff] %v21
  %214 = vst [vmem:[%s1 + $0x170] sm:$0xff] %v22
  %215 = vst [vmem:[%s1 + $0x178] sm:$0xff] %v23
  %216 = vst [vmem:[%s1 + $0x180] sm:$0xff] %v24
  %217 = vst [vmem:[%s1 + $0x188] sm:$0xff] %v25
  %218 = vst [vmem:[%s1 + $0x190] sm:$0xff] %v26
  %219 = vst [vmem:[%s1 + $0x198] sm:$0xff] %v27
  %220 = vst [vmem:[%s1 + $0x1a0] sm:$0xff] %v28
  %221 = vst [vmem:[%s1 + $0x1a8] sm:$0xff] %v29
  %222 = vst [vmem:[%s1 + $0x1b0] sm:$0xff] %v30
  %223 = vst [vmem:[%s1 + $0x1b8] sm:$0xff] %v31
  %224 = vst [vmem:[%s1 + $0x1c0] sm:$0xff] %v32
  %225 = vst [vmem:[%s1 + $0x1c8] sm:$0xff] %v33
  %226 = vst [vmem:[%s1 + $0x1d0] sm:$0xff] %v34
  %227 = vst [vmem:[%s1 + $0x1d8] sm:$0xff] %v35
  %228 = vst [vmem:[%s1 + $0x1e0] sm:$0xff] %v36
  %229 = vst [vmem:[%s1 + $0x1e8] sm:$0xff] %v37
  %230 = vst [vmem:[%s1 + $0x1f0] sm:$0xff] %v38
  %231 = vst [vmem:[%s1 + $0x1f8] sm:$0xff] %v39
  %232 = vst [vmem:[%s1 + $0x300] sm:$0xff] %v40
  %233 = vst [vmem:[%s1 + $0x308] sm:$0xff] %v41
  %234 = vst [vmem:[%s1 + $0x310] sm:$0xff] %v42
  %235 = vst [vmem:[%s1 + $0x318] sm:$0xff] %v43
  %236 = vst [vmem:[%s1 + $0x320] sm:$0xff] %v44
  %237 = vst [vmem:[%s1 + $0x328] sm:$0xff] %v45
  %238 = vst [vmem:[%s1 + $0x330] sm:$0xff] %v46
  %239 = vst [vmem:[%s1 + $0x338] sm:$0xff] %v47
  %240 = vst [vmem:[%s1 + $0x340] sm:$0xff] %v48
  %241 = vst [vmem:[%s1 + $0x348] sm:$0xff] %v49
  %242 = vst [vmem:[%s1 + $0x350] sm:$0xff] %v50
  %243 = vst [vmem:[%s1 + $0x358] sm:$0xff] %v51
  %244 = vst [vmem:[%s1 + $0x360] sm:$0xff] %v52
  %245 = vst [vmem:[%s1 + $0x368] sm:$0xff] %v53
  %246 = vst [vmem:[%s1 + $0x370] sm:$0xff] %v54
  %247 = vst [vmem:[%s1 + $0x378] sm:$0xff] %v55
  %248 = vst [vmem:[%s1 + $0x380] sm:$0xff] %v56
  %249 = vst [vmem:[%s1 + $0x388] sm:$0xff] %v57
  %250 = vst [vmem:[%s1 + $0x390] sm:$0xff] %v58
  %251 = vst [vmem:[%s1 + $0x398] sm:$0xff] %v59
  %252 = vst [vmem:[%s1 + $0x3a0] sm:$0xff] %v60
  %253 = vst [vmem:[%s1 + $0x3a8] sm:$0xff] %v61
  %254 = vst [vmem:[%s1 + $0x3b0] sm:$0xff] %v62
  %255 = vst [vmem:[%s1 + $0x3b8] sm:$0xff] %v63
  %256 = vst [vmem:[%s1 + $0x3c0] sm:$0xff] %v64
  %257 = vst [vmem:[%s1 + $0x3c8] sm:$0xff] %v65
  %258 = vst [vmem:[%s1 + $0x3d0] sm:$0xff] %v66
  %259 = vst [vmem:[%s1 + $0x3d8] sm:$0xff] %v67
  %260 = vst [vmem:[%s1 + $0x3e0] sm:$0xff] %v68
  %261 = vst [vmem:[%s1 + $0x3e8] sm:$0xff] %v69
  %262 = vst [vmem:[%s1 + $0x3f0] sm:$0xff] %v70
  %263 = vst [vmem:[%s1 + $0x3f8] sm:$0xff] %v71
  %264 = vst [vmem:[%s1 + $0x500] sm:$0xff] %v72
  %265 = vst [vmem:[%s1 + $0x508] sm:$0xff] %v73
  %266 = vst [vmem:[%s1 + $0x510] sm:$0xff] %v74
  %267 = vst [vmem:[%s1 + $0x518] sm:$0xff] %v75
  %268 = vst [vmem:[%s1 + $0x520] sm:$0xff] %v76
  %269 = vst [vmem:[%s1 + $0x528] sm:$0xff] %v77
  %270 = vst [vmem:[%s1 + $0x530] sm:$0xff] %v78
  %271 = vst [vmem:[%s1 + $0x538] sm:$0xff] %v79
  %272 = vst [vmem:[%s1 + $0x540] sm:$0xff] %v80
  %273 = vst [vmem:[%s1 + $0x548] sm:$0xff] %v81
  %274 = vst [vmem:[%s1 + $0x550] sm:$0xff] %v82
  %275 = vst [vmem:[%s1 + $0x558] sm:$0xff] %v83
  %276 = vst [vmem:[%s1 + $0x560] sm:$0xff] %v84
  %277 = vst [vmem:[%s1 + $0x568] sm:$0xff] %v85
  %278 = vst [vmem:[%s1 + $0x570] sm:$0xff] %v86
  %279 = vst [vmem:[%s1 + $0x578] sm:$0xff] %v87
  %280 = vst [vmem:[%s1 + $0x580] sm:$0xff] %v88
  %281 = vst [vmem:[%s1 + $0x588] sm:$0xff] %v89
  %282 = vst [vmem:[%s1 + $0x590] sm:$0xff] %v90
  %283 = vst [vmem:[%s1 + $0x598] sm:$0xff] %v91
  %284 = vst [vmem:[%s1 + $0x5a0] sm:$0xff] %v92
  %285 = vst [vmem:[%s1 + $0x5a8] sm:$0xff] %v93
  %286 = vst [vmem:[%s1 + $0x5b0] sm:$0xff] %v94
  %287 = vst [vmem:[%s1 + $0x5b8] sm:$0xff] %v95
  %288 = vst [vmem:[%s1 + $0x5c0] sm:$0xff] %v96
  %289 = vst [vmem:[%s1 + $0x5c8] sm:$0xff] %v97
  %290 = vst [vmem:[%s1 + $0x5d0] sm:$0xff] %v98
  %291 = vst [vmem:[%s1 + $0x5d8] sm:$0xff] %v99
  %292 = vst [vmem:[%s1 + $0x5e0] sm:$0xff] %v100
  %293 = vst [vmem:[%s1 + $0x5e8] sm:$0xff] %v101
  %294 = vst [vmem:[%s1 + $0x5f0] sm:$0xff] %v102
  %295 = vst [vmem:[%s1 + $0x5f8] sm:$0xff] %v103
  %296 = vst [vmem:[%s1 + $0x700] sm:$0xff] %v104
  %297 = vst [vmem:[%s1 + $0x708] sm:$0xff] %v105
  %298 = vst [vmem:[%s1 + $0x710] sm:$0xff] %v106
  %299 = vst [vmem:[%s1 + $0x718] sm:$0xff] %v107
  %300 = vst [vmem:[%s1 + $0x720] sm:$0xff] %v108
  %301 = vst [vmem:[%s1 + $0x728] sm:$0xff] %v109
  %302 = vst [vmem:[%s1 + $0x730] sm:$0xff] %v110
  %303 = vst [vmem:[%s1 + $0x738] sm:$0xff] %v111
  %304 = vst [vmem:[%s1 + $0x740] sm:$0xff] %v112
  %305 = vst [vmem:[%s1 + $0x748] sm:$0xff] %v113
  %306 = vst [vmem:[%s1 + $0x750] sm:$0xff] %v114
  %307 = vst [vmem:[%s1 + $0x758] sm:$0xff] %v115
  %308 = vst [vmem:[%s1 + $0x760] sm:$0xff] %v116
  %309 = vst [vmem:[%s1 + $0x768] sm:$0xff] %v117
  %310 = vst [vmem:[%s1 + $0x770] sm:$0xff] %v118
  %311 = vst [vmem:[%s1 + $0x778] sm:$0xff] %v119
  %312 = vst [vmem:[%s1 + $0x780] sm:$0xff] %v120
  %313 = vst [vmem:[%s1 + $0x788] sm:$0xff] %v121
  %314 = vst [vmem:[%s1 + $0x790] sm:$0xff] %v122
  %315 = vst [vmem:[%s1 + $0x798] sm:$0xff] %v123
  %316 = vst [vmem:[%s1 + $0x7a0] sm:$0xff] %v124
  %317 = vst [vmem:[%s1 + $0x7a8] sm:$0xff] %v125
  %318 = vst [vmem:[%s1 + $0x7b0] sm:$0xff] %v126
  %319 = vst [vmem:[%s1 + $0x7b8] sm:$0xff] %v127
  %320 = vst [vmem:[%s1 + $0x7c0] sm:$0xff] %v128
  %321 = vst [vmem:[%s1 + $0x7c8] sm:$0xff] %v129
  %322 = vst [vmem:[%s1 + $0x7d0] sm:$0xff] %v130
  %323 = vst [vmem:[%s1 + $0x7d8] sm:$0xff] %v131
  %324 = vst [vmem:[%s1 + $0x7e0] sm:$0xff] %v132
  %325 = vst [vmem:[%s1 + $0x7e8] sm:$0xff] %v133
  %326 = vst [vmem:[%s1 + $0x7f0] sm:$0xff] %v134
  %327 = vst [vmem:[%s1 + $0x7f8] sm:$0xff] %v135
  %328 = vst [vmem:[%s1 + $0x900] sm:$0xff] %v136
  %329 = vst [vmem:[%s1 + $0x908] sm:$0xff] %v137
  %330 = vst [vmem:[%s1 + $0x910] sm:$0xff] %v138
  %331 = vst [vmem:[%s1 + $0x918] sm:$0xff] %v139
  %332 = vst [vmem:[%s1 + $0x920] sm:$0xff] %v140
  %333 = vst [vmem:[%s1 + $0x928] sm:$0xff] %v141
  %334 = vst [vmem:[%s1 + $0x930] sm:$0xff] %v142
  %335 = vst [vmem:[%s1 + $0x938] sm:$0xff] %v143
  %336 = vst [vmem:[%s1 + $0x940] sm:$0xff] %v144
  %337 = vst [vmem:[%s1 + $0x948] sm:$0xff] %v145
  %338 = vst [vmem:[%s1 + $0x950] sm:$0xff] %v146
  %339 = vst [vmem:[%s1 + $0x958] sm:$0xff] %v147
  %340 = vst [vmem:[%s1 + $0x960] sm:$0xff] %v148
  %341 = vst [vmem:[%s1 + $0x968] sm:$0xff] %v149
  %342 = vst [vmem:[%s1 + $0x970] sm:$0xff] %v150
  %343 = vst [vmem:[%s1 + $0x978] sm:$0xff] %v151
  %344 = vst [vmem:[%s1 + $0x980] sm:$0xff] %v152
  %345 = vst [vmem:[%s1 + $0x988] sm:$0xff] %v153
  %346 = vst [vmem:[%s1 + $0x990] sm:$0xff] %v154
  %347 = vst [vmem:[%s1 + $0x998] sm:$0xff] %v155
  %348 = vst [vmem:[%s1 + $0x9a0] sm:$0xff] %v156
  %349 = vst [vmem:[%s1 + $0x9a8] sm:$0xff] %v157
  %350 = vst [vmem:[%s1 + $0x9b0] sm:$0xff] %v158
  %351 = vst [vmem:[%s1 + $0x9b8] sm:$0xff] %v159
  %352 = vst [vmem:[%s1 + $0x9c0] sm:$0xff] %v160
  %353 = vst [vmem:[%s1 + $0x9c8] sm:$0xff] %v161
  %354 = vst [vmem:[%s1 + $0x9d0] sm:$0xff] %v162
  %355 = vst [vmem:[%s1 + $0x9d8] sm:$0xff] %v163
  %356 = vst [vmem:[%s1 + $0x9e0] sm:$0xff] %v164
  %357 = vst [vmem:[%s1 + $0x9e8] sm:$0xff] %v165
  %358 = vst [vmem:[%s1 + $0x9f0] sm:$0xff] %v166
  %359 = vst [vmem:[%s1 + $0x9f8] sm:$0xff] %v167
  %360 = vst [vmem:[%s1 + $0xb00] sm:$0xff] %v168
  %361 = vst [vmem:[%s1 + $0xb08] sm:$0xff] %v169
  %362 = vst [vmem:[%s1 + $0xb10] sm:$0xff] %v170
  %363 = vst [vmem:[%s1 + $0xb18] sm:$0xff] %v171
  %364 = vst [vmem:[%s1 + $0xb20] sm:$0xff] %v172
  %365 = vst [vmem:[%s1 + $0xb28] sm:$0xff] %v173
  %366 = vst [vmem:[%s1 + $0xb30] sm:$0xff] %v174
  %367 = vst [vmem:[%s1 + $0xb38] sm:$0xff] %v175
  %368 = vst [vmem:[%s1 + $0xb40] sm:$0xff] %v176
  %369 = vst [vmem:[%s1 + $0xb48] sm:$0xff] %v177
  %370 = vst [vmem:[%s1 + $0xb50] sm:$0xff] %v178
  %371 = vst [vmem:[%s1 + $0xb58] sm:$0xff] %v179
  %372 = vst [vmem:[%s1 + $0xb60] sm:$0xff] %v180
  %373 = vst [vmem:[%s1 + $0xb68] sm:$0xff] %v181
  %374 = vst [vmem:[%s1 + $0xb70] sm:$0xff] %v182
  %375 = vst [vmem:[%s1 + $0xb78] sm:$0xff] %v183
  %376 = vst [vmem:[%s1 + $0xb80] sm:$0xff] %v184
  %377 = vst [vmem:[%s1 + $0xb88] sm:$0xff] %v185
  %378 = vst [vmem:[%s1 + $0xb90] sm:$0xff] %v186
  %379 = vst [vmem:[%s1 + $0xb98] sm:$0xff] %v187
  %380 = vst [vmem:[%s1 + $0xba0] sm:$0xff] %v188
  %381 = vst [vmem:[%s1 + $0xba8] sm:$0xff] %v189
  %382 = vst [vmem:[%s1 + $0xbb0] sm:$0xff] %v190
  %383 = vst [vmem:[%s1 + $0xbb8] sm:$0xff] %v191
  %384 = vst [vmem:[%s1 + $0xbc0] sm:$0xff] %v192
  %385 = vst [vmem:[%s1 + $0xbc8] sm:$0xff] %v193
  %386 = vst [vmem:[%s1 + $0xbd0] sm:$0xff] %v194
  %387 = vst [vmem:[%s1 + $0xbd8] sm:$0xff] %v195
  %388 = vst [vmem:[%s1 + $0xbe0] sm:$0xff] %v196
  %389 = vst [vmem:[%s1 + $0xbe8] sm:$0xff] %v197
  %390 = vst [vmem:[%s1 + $0xbf0] sm:$0xff] %v198
  %391 = vst [vmem:[%s1 + $0xbf8] sm:$0xff] %v199
  %s392 = scalar_lea.vmem %s0, 512
  %v393 = vld [vmem:[%s392] sm:$0xff]
  %v394 = vld [vmem:[%s392 + $0x8] sm:$0xff]
  %v395 = vld [vmem:[%s392 + $0x10] sm:$0xff]
  %v396 = vld [vmem:[%s392 + $0x18] sm:$0xff]
  %v397 = vld [vmem:[%s392 + $0x20] sm:$0xff]
  %v398 = vld [vmem:[%s392 + $0x28] sm:$0xff]
  %v399 = vld [vmem:[%s392 + $0x30] sm:$0xff]
  %v400 = vld [vmem:[%s392 + $0x38] sm:$0xff]
  %v401 = vld [vmem:[%s392 + $0x40] sm:$0xff]
  %v402 = vld [vmem:[%s392 + $0x48] sm:$0xff]
  %v403 = vld [vmem:[%s392 + $0x50] sm:$0xff]
  %v404 = vld [vmem:[%s392 + $0x58] sm:$0xff]
  %v405 = vld [vmem:[%s392 + $0x60] sm:$0xff]
  %v406 = vld [vmem:[%s392 + $0x68] sm:$0xff]
  %v407 = vld [vmem:[%s392 + $0x70] sm:$0xff]
  %v408 = vld [vmem:[%s392 + $0x78] sm:$0xff]
  %v409 = vld [vmem:[%s392 + $0x200] sm:$0xff]
  %v410 = vld [vmem:[%s392 + $0x208] sm:$0xff]
  %v411 = vld [vmem:[%s392 + $0x210] sm:$0xff]
  %v412 = vld [vmem:[%s392 + $0x218] sm:$0xff]
  %v413 = vld [vmem:[%s392 + $0x220] sm:$0xff]
  %v414 = vld [vmem:[%s392 + $0x228] sm:$0xff]
  %v415 = vld [vmem:[%s392 + $0x230] sm:$0xff]
  %v416 = vld [vmem:[%s392 + $0x238] sm:$0xff]
  %v417 = vld [vmem:[%s392 + $0x240] sm:$0xff]
  %v418 = vld [vmem:[%s392 + $0x248] sm:$0xff]
  %v419 = vld [vmem:[%s392 + $0x250] sm:$0xff]
  %v420 = vld [vmem:[%s392 + $0x258] sm:$0xff]
  %v421 = vld [vmem:[%s392 + $0x260] sm:$0xff]
  %v422 = vld [vmem:[%s392 + $0x268] sm:$0xff]
  %v423 = vld [vmem:[%s392 + $0x270] sm:$0xff]
  %v424 = vld [vmem:[%s392 + $0x278] sm:$0xff]
  %v425 = vld [vmem:[%s392 + $0x400] sm:$0xff]
  %v426 = vld [vmem:[%s392 + $0x408] sm:$0xff]
  %v427 = vld [vmem:[%s392 + $0x410] sm:$0xff]
  %v428 = vld [vmem:[%s392 + $0x418] sm:$0xff]
  %v429 = vld [vmem:[%s392 + $0x420] sm:$0xff]
  %v430 = vld [vmem:[%s392 + $0x428] sm:$0xff]
  %v431 = vld [vmem:[%s392 + $0x430] sm:$0xff]
  %v432 = vld [vmem:[%s392 + $0x438] sm:$0xff]
  %v433 = vld [vmem:[%s392 + $0x440] sm:$0xff]
  %v434 = vld [vmem:[%s392 + $0x448] sm:$0xff]
  %v435 = vld [vmem:[%s392 + $0x450] sm:$0xff]
  %v436 = vld [vmem:[%s392 + $0x458] sm:$0xff]
  %v437 = vld [vmem:[%s392 + $0x460] sm:$0xff]
  %v438 = vld [vmem:[%s392 + $0x468] sm:$0xff]
  %v439 = vld [vmem:[%s392 + $0x470] sm:$0xff]
  %v440 = vld [vmem:[%s392 + $0x478] sm:$0xff]
  %v441 = vld [vmem:[%s392 + $0x600] sm:$0xff]
  %v442 = vld [vmem:[%s392 + $0x608] sm:$0xff]
  %v443 = vld [vmem:[%s392 + $0x610] sm:$0xff]
  %v444 = vld [vmem:[%s392 + $0x618] sm:$0xff]
  %v445 = vld [vmem:[%s392 + $0x620] sm:$0xff]
  %v446 = vld [vmem:[%s392 + $0x628] sm:$0xff]
  %v447 = vld [vmem:[%s392 + $0x630] sm:$0xff]
  %v448 = vld [vmem:[%s392 + $0x638] sm:$0xff]
  %v449 = vld [vmem:[%s392 + $0x640] sm:$0xff]
  %v450 = vld [vmem:[%s392 + $0x648] sm:$0xff]
  %v451 = vld [vmem:[%s392 + $0x650] sm:$0xff]
  %v452 = vld [vmem:[%s392 + $0x658] sm:$0xff]
  %v453 = vld [vmem:[%s392 + $0x660] sm:$0xff]
  %v454 = vld [vmem:[%s392 + $0x668] sm:$0xff]
  %v455 = vld [vmem:[%s392 + $0x670] sm:$0xff]
  %v456 = vld [vmem:[%s392 + $0x678] sm:$0xff]
  %v457 = vld [vmem:[%s392 + $0x800] sm:$0xff]
  %v458 = vld [vmem:[%s392 + $0x808] sm:$0xff]
  %v459 = vld [vmem:[%s392 + $0x810] sm:$0xff]
  %v460 = vld [vmem:[%s392 + $0x818] sm:$0xff]
  %v461 = vld [vmem:[%s392 + $0x820] sm:$0xff]
  %v462 = vld [vmem:[%s392 + $0x828] sm:$0xff]
  %v463 = vld [vmem:[%s392 + $0x830] sm:$0xff]
  %v464 = vld [vmem:[%s392 + $0x838] sm:$0xff]
  %v465 = vld [vmem:[%s392 + $0x840] sm:$0xff]
  %v466 = vld [vmem:[%s392 + $0x848] sm:$0xff]
  %v467 = vld [vmem:[%s392 + $0x850] sm:$0xff]
  %v468 = vld [vmem:[%s392 + $0x858] sm:$0xff]
  %v469 = vld [vmem:[%s392 + $0x860] sm:$0xff]
  %v470 = vld [vmem:[%s392 + $0x868] sm:$0xff]
  %v471 = vld [vmem:[%s392 + $0x870] sm:$0xff]
  %v472 = vld [vmem:[%s392 + $0x878] sm:$0xff]
  %473 = vst [vmem:[%s1] sm:$0xff] %v393
  %474 = vst [vmem:[%s1 + $0x8] sm:$0xff] %v394
  %475 = vst [vmem:[%s1 + $0x10] sm:$0xff] %v395
  %476 = vst [vmem:[%s1 + $0x18] sm:$0xff] %v396
  %477 = vst [vmem:[%s1 + $0x20] sm:$0xff] %v397
  %478 = vst [vmem:[%s1 + $0x28] sm:$0xff] %v398
  %479 = vst [vmem:[%s1 + $0x30] sm:$0xff] %v399
  %480 = vst [vmem:[%s1 + $0x38] sm:$0xff] %v400
  %481 = vst [vmem:[%s1 + $0x40] sm:$0xff] %v401
  %482 = vst [vmem:[%s1 + $0x48] sm:$0xff] %v402
  %483 = vst [vmem:[%s1 + $0x50] sm:$0xff] %v403
  %484 = vst [vmem:[%s1 + $0x58] sm:$0xff] %v404
  %485 = vst [vmem:[%s1 + $0x60] sm:$0xff] %v405
  %486 = vst [vmem:[%s1 + $0x68] sm:$0xff] %v406
  %487 = vst [vmem:[%s1 + $0x70] sm:$0xff] %v407
  %488 = vst [vmem:[%s1 + $0x78] sm:$0xff] %v408
  %489 = vst [vmem:[%s1 + $0x200] sm:$0xff] %v409
  %490 = vst [vmem:[%s1 + $0x208] sm:$0xff] %v410
  %491 = vst [vmem:[%s1 + $0x210] sm:$0xff] %v411
  %492 = vst [vmem:[%s1 + $0x218] sm:$0xff] %v412
  %493 = vst [vmem:[%s1 + $0x220] sm:$0xff] %v413
  %494 = vst [vmem:[%s1 + $0x228] sm:$0xff] %v414
  %495 = vst [vmem:[%s1 + $0x230] sm:$0xff] %v415
  %496 = vst [vmem:[%s1 + $0x238] sm:$0xff] %v416
  %497 = vst [vmem:[%s1 + $0x240] sm:$0xff] %v417
  %498 = vst [vmem:[%s1 + $0x248] sm:$0xff] %v418
  %499 = vst [vmem:[%s1 + $0x250] sm:$0xff] %v419
  %500 = vst [vmem:[%s1 + $0x258] sm:$0xff] %v420
  %501 = vst [vmem:[%s1 + $0x260] sm:$0xff] %v421
  %502 = vst [vmem:[%s1 + $0x268] sm:$0xff] %v422
  %503 = vst [vmem:[%s1 + $0x270] sm:$0xff] %v423
  %504 = vst [vmem:[%s1 + $0x278] sm:$0xff] %v424
  %505 = vst [vmem:[%s1 + $0x400] sm:$0xff] %v425
  %506 = vst [vmem:[%s1 + $0x408] sm:$0xff] %v426
  %507 = vst [vmem:[%s1 + $0x410] sm:$0xff] %v427
  %508 = vst [vmem:[%s1 + $0x418] sm:$0xff] %v428
  %509 = vst [vmem:[%s1 + $0x420] sm:$0xff] %v429
  %510 = vst [vmem:[%s1 + $0x428] sm:$0xff] %v430
  %511 = vst [vmem:[%s1 + $0x430] sm:$0xff] %v431
  %512 = vst [vmem:[%s1 + $0x438] sm:$0xff] %v432
  %513 = vst [vmem:[%s1 + $0x440] sm:$0xff] %v433
  %514 = vst [vmem:[%s1 + $0x448] sm:$0xff] %v434
  %515 = vst [vmem:[%s1 + $0x450] sm:$0xff] %v435
  %516 = vst [vmem:[%s1 + $0x458] sm:$0xff] %v436
  %517 = vst [vmem:[%s1 + $0x460] sm:$0xff] %v437
  %518 = vst [vmem:[%s1 + $0x468] sm:$0xff] %v438
  %519 = vst [vmem:[%s1 + $0x470] sm:$0xff] %v439
  %520 = vst [vmem:[%s1 + $0x478] sm:$0xff] %v440
  %521 = vst [vmem:[%s1 + $0x600] sm:$0xff] %v441
  %522 = vst [vmem:[%s1 + $0x608] sm:$0xff] %v442
  %523 = vst [vmem:[%s1 + $0x610] sm:$0xff] %v443
  %524 = vst [vmem:[%s1 + $0x618] sm:$0xff] %v444
  %525 = vst [vmem:[%s1 + $0x620] sm:$0xff] %v445
  %526 = vst [vmem:[%s1 + $0x628] sm:$0xff] %v446
  %527 = vst [vmem:[%s1 + $0x630] sm:$0xff] %v447
  %528 = vst [vmem:[%s1 + $0x638] sm:$0xff] %v448
  %529 = vst [vmem:[%s1 + $0x640] sm:$0xff] %v449
  %530 = vst [vmem:[%s1 + $0x648] sm:$0xff] %v450
  %531 = vst [vmem:[%s1 + $0x650] sm:$0xff] %v451
  %532 = vst [vmem:[%s1 + $0x658] sm:$0xff] %v452
  %533 = vst [vmem:[%s1 + $0x660] sm:$0xff] %v453
  %534 = vst [vmem:[%s1 + $0x668] sm:$0xff] %v454
  %535 = vst [vmem:[%s1 + $0x670] sm:$0xff] %v455
  %536 = vst [vmem:[%s1 + $0x678] sm:$0xff] %v456
  %537 = vst [vmem:[%s1 + $0x800] sm:$0xff] %v457
  %538 = vst [vmem:[%s1 + $0x808] sm:$0xff] %v458
  %539 = vst [vmem:[%s1 + $0x810] sm:$0xff] %v459
  %540 = vst [vmem:[%s1 + $0x818] sm:$0xff] %v460
  %541 = vst [vmem:[%s1 + $0x820] sm:$0xff] %v461
  %542 = vst [vmem:[%s1 + $0x828] sm:$0xff] %v462
  %543 = vst [vmem:[%s1 + $0x830] sm:$0xff] %v463
  %544 = vst [vmem:[%s1 + $0x838] sm:$0xff] %v464
  %545 = vst [vmem:[%s1 + $0x840] sm:$0xff] %v465
  %546 = vst [vmem:[%s1 + $0x848] sm:$0xff] %v466
  %547 = vst [vmem:[%s1 + $0x850] sm:$0xff] %v467
  %548 = vst [vmem:[%s1 + $0x858] sm:$0xff] %v468
  %549 = vst [vmem:[%s1 + $0x860] sm:$0xff] %v469
  %550 = vst [vmem:[%s1 + $0x868] sm:$0xff] %v470
  %551 = vst [vmem:[%s1 + $0x870] sm:$0xff] %v471
  %552 = vst [vmem:[%s1 + $0x878] sm:$0xff] %v472
  %s553 = scalar_lea.vmem %s1, 2560
  %554 = vst [vmem:[%s553] sm:$0xff] 0.0
  %555 = vst [vmem:[%s553 + $0x8] sm:$0xff] 0.0
  %556 = vst [vmem:[%s553 + $0x10] sm:$0xff] 0.0
  %557 = vst [vmem:[%s553 + $0x18] sm:$0xff] 0.0
  %558 = vst [vmem:[%s553 + $0x20] sm:$0xff] 0.0
  %559 = vst [vmem:[%s553 + $0x28] sm:$0xff] 0.0
  %560 = vst [vmem:[%s553 + $0x30] sm:$0xff] 0.0
  %561 = vst [vmem:[%s553 + $0x38] sm:$0xff] 0.0
  %562 = vst [vmem:[%s553 + $0x40] sm:$0xff] 0.0
  %563 = vst [vmem:[%s553 + $0x48] sm:$0xff] 0.0
  %564 = vst [vmem:[%s553 + $0x50] sm:$0xff] 0.0
  %565 = vst [vmem:[%s553 + $0x58] sm:$0xff] 0.0
  %566 = vst [vmem:[%s553 + $0x60] sm:$0xff] 0.0
  %567 = vst [vmem:[%s553 + $0x68] sm:$0xff] 0.0
  %568 = vst [vmem:[%s553 + $0x70] sm:$0xff] 0.0
  %569 = vst [vmem:[%s553 + $0x78] sm:$0xff] 0.0
  %v570 = vld [vmem:[%s0 + $0x80] sm:$0xff]
  %v571 = vld [vmem:[%s0 + $0x88] sm:$0xff]
  %v572 = vld [vmem:[%s0 + $0x90] sm:$0xff]
  %v573 = vld [vmem:[%s0 + $0x98] sm:$0xff]
  %v574 = vld [vmem:[%s0 + $0xa0] sm:$0xff]
  %v575 = vld [vmem:[%s0 + $0xa8] sm:$0xff]
  %v576 = vld [vmem:[%s0 + $0xb0] sm:$0xff]
  %v577 = vld [vmem:[%s0 + $0xb8] sm:$0xff]
  %v578 = vld [vmem:[%s0 + $0xc0] sm:$0xff]
  %v579 = vld [vmem:[%s0 + $0xc8] sm:$0xff]
  %v580 = vld [vmem:[%s0 + $0xd0] sm:$0xff]
  %v581 = vld [vmem:[%s0 + $0xd8] sm:$0xff]
  %v582 = vld [vmem:[%s0 + $0xe0] sm:$0xff]
  %v583 = vld [vmem:[%s0 + $0xe8] sm:$0xff]
  %v584 = vld [vmem:[%s0 + $0xf0] sm:$0xff]
  %v585 = vld [vmem:[%s0 + $0xf8] sm:$0xff]
  %v586 = vld [vmem:[%s0 + $0x280] sm:$0xff]
  %v587 = vld [vmem:[%s0 + $0x288] sm:$0xff]
  %v588 = vld [vmem:[%s0 + $0x290] sm:$0xff]
  %v589 = vld [vmem:[%s0 + $0x298] sm:$0xff]
  %v590 = vld [vmem:[%s0 + $0x2a0] sm:$0xff]
  %v591 = vld [vmem:[%s0 + $0x2a8] sm:$0xff]
  %v592 = vld [vmem:[%s0 + $0x2b0] sm:$0xff]
  %v593 = vld [vmem:[%s0 + $0x2b8] sm:$0xff]
  %v594 = vld [vmem:[%s0 + $0x2c0] sm:$0xff]
  %v595 = vld [vmem:[%s0 + $0x2c8] sm:$0xff]
  %v596 = vld [vmem:[%s0 + $0x2d0] sm:$0xff]
  %v597 = vld [vmem:[%s0 + $0x2d8] sm:$0xff]
  %v598 = vld [vmem:[%s0 + $0x2e0] sm:$0xff]
  %v599 = vld [vmem:[%s0 + $0x2e8] sm:$0xff]
  %v600 = vld [vmem:[%s0 + $0x2f0] sm:$0xff]
  %v601 = vld [vmem:[%s0 + $0x2f8] sm:$0xff]
  %v602 = vld [vmem:[%s0 + $0x480] sm:$0xff]
  %v603 = vld [vmem:[%s0 + $0x488] sm:$0xff]
  %v604 = vld [vmem:[%s0 + $0x490] sm:$0xff]
  %v605 = vld [vmem:[%s0 + $0x498] sm:$0xff]
  %v606 = vld [vmem:[%s0 + $0x4a0] sm:$0xff]
  %v607 = vld [vmem:[%s0 + $0x4a8] sm:$0xff]
  %v608 = vld [vmem:[%s0 + $0x4b0] sm:$0xff]
  %v609 = vld [vmem:[%s0 + $0x4b8] sm:$0xff]
  %v610 = vld [vmem:[%s0 + $0x4c0] sm:$0xff]
  %v611 = vld [vmem:[%s0 + $0x4c8] sm:$0xff]
  %v612 = vld [vmem:[%s0 + $0x4d0] sm:$0xff]
  %v613 = vld [vmem:[%s0 + $0x4d8] sm:$0xff]
  %v614 = vld [vmem:[%s0 + $0x4e0] sm:$0xff]
  %v615 = vld [vmem:[%s0 + $0x4e8] sm:$0xff]
  %v616 = vld [vmem:[%s0 + $0x4f0] sm:$0xff]
  %v617 = vld [vmem:[%s0 + $0x4f8] sm:$0xff]
  %v618 = vld [vmem:[%s0 + $0x680] sm:$0xff]
  %v619 = vld [vmem:[%s0 + $0x688] sm:$0xff]
  %v620 = vld [vmem:[%s0 + $0x690] sm:$0xff]
  %v621 = vld [vmem:[%s0 + $0x698] sm:$0xff]
  %v622 = vld [vmem:[%s0 + $0x6a0] sm:$0xff]
  %v623 = vld [vmem:[%s0 + $0x6a8] sm:$0xff]
  %v624 = vld [vmem:[%s0 + $0x6b0] sm:$0xff]
  %v625 = vld [vmem:[%s0 + $0x6b8] sm:$0xff]
  %v626 = vld [vmem:[%s0 + $0x6c0] sm:$0xff]
  %v627 = vld [vmem:[%s0 + $0x6c8] sm:$0xff]
  %v628 = vld [vmem:[%s0 + $0x6d0] sm:$0xff]
  %v629 = vld [vmem:[%s0 + $0x6d8] sm:$0xff]
  %v630 = vld [vmem:[%s0 + $0x6e0] sm:$0xff]
  %v631 = vld [vmem:[%s0 + $0x6e8] sm:$0xff]
  %v632 = vld [vmem:[%s0 + $0x6f0] sm:$0xff]
  %v633 = vld [vmem:[%s0 + $0x6f8] sm:$0xff]
  %v634 = vld [vmem:[%s0 + $0x880] sm:$0xff]
  %v635 = vld [vmem:[%s0 + $0x888] sm:$0xff]
  %v636 = vld [vmem:[%s0 + $0x890] sm:$0xff]
  %v637 = vld [vmem:[%s0 + $0x898] sm:$0xff]
  %v638 = vld [vmem:[%s0 + $0x8a0] sm:$0xff]
  %v639 = vld [vmem:[%s0 + $0x8a8] sm:$0xff]
  %v640 = vld [vmem:[%s0 + $0x8b0] sm:$0xff]
  %v641 = vld [vmem:[%s0 + $0x8b8] sm:$0xff]
  %v642 = vld [vmem:[%s0 + $0x8c0] sm:$0xff]
  %v643 = vld [vmem:[%s0 + $0x8c8] sm:$0xff]
  %v644 = vld [vmem:[%s0 + $0x8d0] sm:$0xff]
  %v645 = vld [vmem:[%s0 + $0x8d8] sm:$0xff]
  %v646 = vld [vmem:[%s0 + $0x8e0] sm:$0xff]
  %v647 = vld [vmem:[%s0 + $0x8e8] sm:$0xff]
  %v648 = vld [vmem:[%s0 + $0x8f0] sm:$0xff]
  %v649 = vld [vmem:[%s0 + $0x8f8] sm:$0xff]
  %s650 = scalar_lea.vmem %s1, 512
  %651 = vst [vmem:[%s650 + $0x80] sm:$0xff] %v570
  %652 = vst [vmem:[%s650 + $0x88] sm:$0xff] %v571
  %653 = vst [vmem:[%s650 + $0x90] sm:$0xff] %v572
  %654 = vst [vmem:[%s650 + $0x98] sm:$0xff] %v573
  %655 = vst [vmem:[%s650 + $0xa0] sm:$0xff] %v574
  %656 = vst [vmem:[%s650 + $0xa8] sm:$0xff] %v575
  %657 = vst [vmem:[%s650 + $0xb0] sm:$0xff] %v576
  %658 = vst [vmem:[%s650 + $0xb8] sm:$0xff] %v577
  %659 = vst [vmem:[%s650 + $0xc0] sm:$0xff] %v578
  %660 = vst [vmem:[%s650 + $0xc8] sm:$0xff] %v579
  %661 = vst [vmem:[%s650 + $0xd0] sm:$0xff] %v580
  %662 = vst [vmem:[%s650 + $0xd8] sm:$0xff] %v581
  %663 = vst [vmem:[%s650 + $0xe0] sm:$0xff] %v582
  %664 = vst [vmem:[%s650 + $0xe8] sm:$0xff] %v583
  %665 = vst [vmem:[%s650 + $0xf0] sm:$0xff] %v584
  %666 = vst [vmem:[%s650 + $0xf8] sm:$0xff] %v585
  %667 = vst [vmem:[%s650 + $0x280] sm:$0xff] %v586
  %668 = vst [vmem:[%s650 + $0x288] sm:$0xff] %v587
  %669 = vst [vmem:[%s650 + $0x290] sm:$0xff] %v588
  %670 = vst [vmem:[%s650 + $0x298] sm:$0xff] %v589
  %671 = vst [vmem:[%s650 + $0x2a0] sm:$0xff] %v590
  %672 = vst [vmem:[%s650 + $0x2a8] sm:$0xff] %v591
  %673 = vst [vmem:[%s650 + $0x2b0] sm:$0xff] %v592
  %674 = vst [vmem:[%s650 + $0x2b8] sm:$0xff] %v593
  %675 = vst [vmem:[%s650 + $0x2c0] sm:$0xff] %v594
  %676 = vst [vmem:[%s650 + $0x2c8] sm:$0xff] %v595
  %677 = vst [vmem:[%s650 + $0x2d0] sm:$0xff] %v596
  %678 = vst [vmem:[%s650 + $0x2d8] sm:$0xff] %v597
  %679 = vst [vmem:[%s650 + $0x2e0] sm:$0xff] %v598
  %680 = vst [vmem:[%s650 + $0x2e8] sm:$0xff] %v599
  %681 = vst [vmem:[%s650 + $0x2f0] sm:$0xff] %v600
  %682 = vst [vmem:[%s650 + $0x2f8] sm:$0xff] %v601
  %683 = vst [vmem:[%s650 + $0x480] sm:$0xff] %v602
  %684 = vst [vmem:[%s650 + $0x488] sm:$0xff] %v603
  %685 = vst [vmem:[%s650 + $0x490] sm:$0xff] %v604
  %686 = vst [vmem:[%s650 + $0x498] sm:$0xff] %v605
  %687 = vst [vmem:[%s650 + $0x4a0] sm:$0xff] %v606
  %688 = vst [vmem:[%s650 + $0x4a8] sm:$0xff] %v607
  %689 = vst [vmem:[%s650 + $0x4b0] sm:$0xff] %v608
  %690 = vst [vmem:[%s650 + $0x4b8] sm:$0xff] %v609
  %691 = vst [vmem:[%s650 + $0x4c0] sm:$0xff] %v610
  %692 = vst [vmem:[%s650 + $0x4c8] sm:$0xff] %v611
  %693 = vst [vmem:[%s650 + $0x4d0] sm:$0xff] %v612
  %694 = vst [vmem:[%s650 + $0x4d8] sm:$0xff] %v613
  %695 = vst [vmem:[%s650 + $0x4e0] sm:$0xff] %v614
  %696 = vst [vmem:[%s650 + $0x4e8] sm:$0xff] %v615
  %697 = vst [vmem:[%s650 + $0x4f0] sm:$0xff] %v616
  %698 = vst [vmem:[%s650 + $0x4f8] sm:$0xff] %v617
  %699 = vst [vmem:[%s650 + $0x680] sm:$0xff] %v618
  %700 = vst [vmem:[%s650 + $0x688] sm:$0xff] %v619
  %701 = vst [vmem:[%s650 + $0x690] sm:$0xff] %v620
  %702 = vst [vmem:[%s650 + $0x698] sm:$0xff] %v621
  %703 = vst [vmem:[%s650 + $0x6a0] sm:$0xff] %v622
  %704 = vst [vmem:[%s650 + $0x6a8] sm:$0xff] %v623
  %705 = vst [vmem:[%s650 + $0x6b0] sm:$0xff] %v624
  %706 = vst [vmem:[%s650 + $0x6b8] sm:$0xff] %v625
  %707 = vst [vmem:[%s650 + $0x6c0] sm:$0xff] %v626
  %708 = vst [vmem:[%s650 + $0x6c8] sm:$0xff] %v627
  %709 = vst [vmem:[%s650 + $0x6d0] sm:$0xff] %v628
  %710 = vst [vmem:[%s650 + $0x6d8] sm:$0xff] %v629
  %711 = vst [vmem:[%s650 + $0x6e0] sm:$0xff] %v630
  %712 = vst [vmem:[%s650 + $0x6e8] sm:$0xff] %v631
  %713 = vst [vmem:[%s650 + $0x6f0] sm:$0xff] %v632
  %714 = vst [vmem:[%s650 + $0x6f8] sm:$0xff] %v633
  %715 = vst [vmem:[%s650 + $0x880] sm:$0xff] %v634
  %716 = vst [vmem:[%s650 + $0x888] sm:$0xff] %v635
  %717 = vst [vmem:[%s650 + $0x890] sm:$0xff] %v636
  %718 = vst [vmem:[%s650 + $0x898] sm:$0xff] %v637
  %719 = vst [vmem:[%s650 + $0x8a0] sm:$0xff] %v638
  %720 = vst [vmem:[%s650 + $0x8a8] sm:$0xff] %v639
  %721 = vst [vmem:[%s650 + $0x8b0] sm:$0xff] %v640
  %722 = vst [vmem:[%s650 + $0x8b8] sm:$0xff] %v641
  %723 = vst [vmem:[%s650 + $0x8c0] sm:$0xff] %v642
  %724 = vst [vmem:[%s650 + $0x8c8] sm:$0xff] %v643
  %725 = vst [vmem:[%s650 + $0x8d0] sm:$0xff] %v644
  %726 = vst [vmem:[%s650 + $0x8d8] sm:$0xff] %v645
  %727 = vst [vmem:[%s650 + $0x8e0] sm:$0xff] %v646
  %728 = vst [vmem:[%s650 + $0x8e8] sm:$0xff] %v647
  %729 = vst [vmem:[%s650 + $0x8f0] sm:$0xff] %v648
  %730 = vst [vmem:[%s650 + $0x8f8] sm:$0xff] %v649
  %731 = vst [vmem:[%s1 + $0x80] sm:$0xff] 0.0
  %732 = vst [vmem:[%s1 + $0x88] sm:$0xff] 0.0
  %733 = vst [vmem:[%s1 + $0x90] sm:$0xff] 0.0
  %734 = vst [vmem:[%s1 + $0x98] sm:$0xff] 0.0
  %735 = vst [vmem:[%s1 + $0xa0] sm:$0xff] 0.0
  %736 = vst [vmem:[%s1 + $0xa8] sm:$0xff] 0.0
  %737 = vst [vmem:[%s1 + $0xb0] sm:$0xff] 0.0
  %738 = vst [vmem:[%s1 + $0xb8] sm:$0xff] 0.0
  %739 = vst [vmem:[%s1 + $0xc0] sm:$0xff] 0.0
  %740 = vst [vmem:[%s1 + $0xc8] sm:$0xff] 0.0
  %741 = vst [vmem:[%s1 + $0xd0] sm:$0xff] 0.0
  %742 = vst [vmem:[%s1 + $0xd8] sm:$0xff] 0.0
  %743 = vst [vmem:[%s1 + $0xe0] sm:$0xff] 0.0
  %744 = vst [vmem:[%s1 + $0xe8] sm:$0xff] 0.0
  %745 = vst [vmem:[%s1 + $0xf0] sm:$0xff] 0.0
  %746 = vst [vmem:[%s1 + $0xf8] sm:$0xff] 0.0
  // Predicated region
  $region6: #{up_block_forward.3} parent=0 // pred_check
    _
  $region7: #{up_block_forward.3} parent=0 // pred_check_branch
    %748 = sbr.rel (0) target = $region9
  $region8: #{up_block_forward.3} parent=0 // pred_region
    _
  $region9: #{up_block_forward.3} parent=0 // pred_fallthru
    _
  // Predicated region
  $region10: #{up_block_forward.3} parent=0 // pred_check
    _
  $region11: #{up_block_forward.3} parent=0 // pred_check_branch
    %750 = sbr.rel (0) target = $region13
  $region12: #{up_block_forward.3} parent=0 // pred_region
    _
  $region13: #{up_block_forward.3} parent=0 // pred_fallthru
    _

</llo_original>
